<compile_context>
chip_gen: v5e
topology: v5e:2x2
jax: 0.10.0
libtpu: 0.0.40
codegen_flags: <defaults>
</compile_context>

<pallas_src>
import numpy as np
import jax
import jax.numpy as jnp
from jax.experimental import pallas as pl
from jax.experimental.pallas import tpu as pltpu

LRELU_SLOPE = 0.01   # F.leaky_relu default negative_slope
BN_EPS = 1e-5        # nn.BatchNorm default eps

_COMPILER_PARAMS = pltpu.CompilerParams(
    dimension_semantics=("arbitrary",),
    vmem_limit_bytes=32 * 1024 * 1024,
)


# --------------------------------------------------------------------------
# Kernel 1: im2col conv (single K=9*Cin matmul) + bias + leaky_relu + BN2d
# --------------------------------------------------------------------------
def _conv_bn_kernel(p_ref, w_ref, b_ref, g_ref, beta_ref, o_ref):
    # p: (R, 9*Cin)   w: (9*Cin, Cout)   b/g/beta: (1, Cout)   o: (R, Cout)
    acc = jnp.dot(p_ref[...].astype(jnp.bfloat16),
                  w_ref[...].astype(jnp.bfloat16),
                  preferred_element_type=jnp.float32)
    acc = acc + b_ref[...]
    acc = jnp.where(acc >= 0, acc, LRELU_SLOPE * acc)            # F.leaky_relu
    # BatchNorm2d, training-mode batch stats over all rows (= N*H*W), biased var
    mean = jnp.mean(acc, axis=0, keepdims=True)
    var = jnp.maximum(jnp.mean(acc * acc, axis=0, keepdims=True) - mean * mean, 0.0)
    o_ref[...] = (acc - mean) * jax.lax.rsqrt(var + BN_EPS) * g_ref[...] + beta_ref[...]


def conv_lrelu_bn(x_nhwc, w, b, gamma, beta):
    B, H, W, Cin = x_nhwc.shape
    Cout = w.shape[-1]
    R, K = B * H * W, 9 * Cin
    xp = jnp.pad(x_nhwc, ((0, 0), (1, 1), (1, 1), (0, 0)))
    # im2col: tap order (dy, dx, cin) matches w.reshape(9*Cin, Cout)
    patches = jnp.concatenate(
        [xp[:, dy:dy + H, dx:dx + W, :] for dy in range(3) for dx in range(3)],
        axis=-1).reshape(R, K)
    w2d = w.reshape(K, Cout)
    out = pl.pallas_call(
        _conv_bn_kernel,
        out_shape=jax.ShapeDtypeStruct((R, Cout), jnp.float32),
        grid=(1,),
        in_specs=[
            pl.BlockSpec((R, K), lambda i: (0, 0)),
            pl.BlockSpec((K, Cout), lambda i: (0, 0)),
            pl.BlockSpec((1, Cout), lambda i: (0, 0)),
            pl.BlockSpec((1, Cout), lambda i: (0, 0)),
            pl.BlockSpec((1, Cout), lambda i: (0, 0)),
        ],
        out_specs=pl.BlockSpec((R, Cout), lambda i: (0, 0)),
        compiler_params=_COMPILER_PARAMS,
    )(patches, w2d, b, gamma, beta)
    return out.reshape(B, H, W, Cout)


# --------------------------------------------------------------------------
# Kernel 2: bilinear resize (align_corners=True) as ONE lane-dense matmul
# --------------------------------------------------------------------------
def _interp_kernel(r_ref, x_ref, o_ref):
    # r: (P, Q)   x: (Q, B*C)   o: (P, B*C)
    o_ref[...] = jnp.dot(r_ref[...].astype(jnp.bfloat16),
                         x_ref[...].astype(jnp.bfloat16),
                         preferred_element_type=jnp.float32)


def _bilinear_matrix(in_size, out_size):
    # align_corners=True interpolation weights, shape (out_size, in_size)
    if out_size == 1:
        src = np.zeros((1,), np.float64)
    else:
        src = np.arange(out_size, dtype=np.float64) * (in_size - 1) / (out_size - 1)
    lo = np.floor(src).astype(np.int64)
    lo = np.minimum(lo, in_size - 1)
    hi = np.minimum(lo + 1, in_size - 1)
    frac = (src - lo).astype(np.float32)
    Rm = np.zeros((out_size, in_size), np.float32)
    Rm[np.arange(out_size), lo] += (1.0 - frac)
    Rm[np.arange(out_size), hi] += frac
    return Rm


def bilinear_resize(x_nhwc, out_hw):
    B, H, W, C = x_nhwc.shape
    OH, OW = out_hw
    Rmat = jnp.asarray(np.kron(_bilinear_matrix(H, OH), _bilinear_matrix(W, OW)),
                       dtype=jnp.float32)                        # (P, Q)
    P, Q = OH * OW, H * W
    # (B,H,W,C) -> (Q, B*C): the output (P, B*C) is lane-dense (B*C = 128 here)
    x_qc = jnp.transpose(x_nhwc.reshape(B, Q, C), (1, 0, 2)).reshape(Q, B * C)
    out = pl.pallas_call(
        _interp_kernel,
        out_shape=jax.ShapeDtypeStruct((P, B * C), jnp.float32),
        grid=(1,),
        in_specs=[
            pl.BlockSpec((P, Q), lambda i: (0, 0)),
            pl.BlockSpec((Q, B * C), lambda i: (0, 0)),
        ],
        out_specs=pl.BlockSpec((P, B * C), lambda i: (0, 0)),
        compiler_params=_COMPILER_PARAMS,
    )(Rmat, x_qc)
    return jnp.transpose(out.reshape(P, B, C), (1, 0, 2)).reshape(B, OH, OW, C)


# --------------------------------------------------------------------------
# Kernel 3: fused [avg/max pools of both branches] + fc1 + leaky_relu
#           + BatchNorm1d + fc2 + leaky_relu
# (The (B,256) feature concat [x2_avg|x2_max|x1_avg|x1_max] is folded into a
#  4-way split of the fc1 weight, so it never materializes.)
# --------------------------------------------------------------------------
def _pool_head_kernel(x1_ref, x2_ref, w1_ref, b1_ref, g_ref, be_ref,
                      w2_ref, b2_ref, o_ref):
    x1 = x1_ref[...]                                  # (B, S1, C)
    x2 = x2_ref[...]                                  # (B, S2, C)
    C = x1.shape[-1]
    x1_avg = jnp.mean(x1, axis=1)                     # (B, C)  AdaptiveAvgPool2d((1,1))
    x1_max = jnp.max(x1, axis=1)                      # (B, C)  AdaptiveMaxPool2d((1,1))
    x2_avg = jnp.mean(x2, axis=1)
    x2_max = jnp.max(x2, axis=1)

    w1 = w1_ref[...]                                  # (4*C, Hid), rows = concat order
    h = (jnp.dot(x2_avg, w1[0 * C:1 * C], preferred_element_type=jnp.float32)
         + jnp.dot(x2_max, w1[1 * C:2 * C], preferred_element_type=jnp.float32)
         + jnp.dot(x1_avg, w1[2 * C:3 * C], preferred_element_type=jnp.float32)
         + jnp.dot(x1_max, w1[3 * C:4 * C], preferred_element_type=jnp.float32)
         + b1_ref[...])
    h = jnp.where(h >= 0, h, LRELU_SLOPE * h)         # F.leaky_relu
    # BatchNorm1d, training-mode batch stats (biased variance)
    mean = jnp.mean(h, axis=0, keepdims=True)
    var = jnp.maximum(jnp.mean(h * h, axis=0, keepdims=True) - mean * mean, 0.0)
    h = (h - mean) * jax.lax.rsqrt(var + BN_EPS) * g_ref[...] + be_ref[...]

    y = jnp.dot(h, w2_ref[...], preferred_element_type=jnp.float32) + b2_ref[...]
    o_ref[...] = jnp.where(y >= 0, y, LRELU_SLOPE * y)


def pool_head(x1_nhwc, x2_nhwc, w1, b1, gamma, beta, w2, b2):
    B, H1s, W1s, C = x1_nhwc.shape
    _, H2s, W2s, _ = x2_nhwc.shape
    S1, S2 = H1s * W1s, H2s * W2s
    F_in, Hid = w1.shape
    NC = w2.shape[1]
    x1f = x1_nhwc.reshape(B, S1, C)
    x2f = x2_nhwc.reshape(B, S2, C)
    return pl.pallas_call(
        _pool_head_kernel,
        out_shape=jax.ShapeDtypeStruct((B, NC), jnp.float32),
        grid=(1,),
        in_specs=[
            pl.BlockSpec((B, S1, C), lambda i: (0, 0, 0)),
            pl.BlockSpec((B, S2, C), lambda i: (0, 0, 0)),
            pl.BlockSpec((F_in, Hid), lambda i: (0, 0)),
            pl.BlockSpec((1, Hid), lambda i: (0, 0)),
            pl.BlockSpec((1, Hid), lambda i: (0, 0)),
            pl.BlockSpec((1, Hid), lambda i: (0, 0)),
            pl.BlockSpec((Hid, NC), lambda i: (0, 0)),
            pl.BlockSpec((1, NC), lambda i: (0, 0)),
        ],
        out_specs=pl.BlockSpec((B, NC), lambda i: (0, 0)),
        compiler_params=_COMPILER_PARAMS,
    )(x1f, x2f, w1, b1, gamma, beta, w2, b2)


# --------------------------------------------------------------------------
# Undefined sub-modules from the reference source
# --------------------------------------------------------------------------
def transformer_block_stub(x_nhwc):
    # TODO(synk): `TransformerBlock` is not defined in the reference source; identity pass-through.
    return x_nhwc


def block_stub(x_nhwc):
    # TODO(synk): `Block` is not defined in the reference source; identity pass-through (64ch, 16x16 preserved).
    return x_nhwc


# --------------------------------------------------------------------------
# Full DGG forward
# --------------------------------------------------------------------------
def dgg_forward(x_nchw, params):
    x = jnp.squeeze(x_nchw)                               # torch: x.squeeze()
    x = jnp.transpose(x, (0, 2, 3, 1))                    # NCHW -> NHWC

    # conv1 + leaky_relu + bn1  (fused, single im2col matmul)
    x = conv_lrelu_bn(x, params["conv_w"], params["conv_b"],
                      params["bn1_g"], params["bn1_b"])   # (B, H, W, 64)

    # transformer branch
    x1 = transformer_block_stub(x)
    x1 = transformer_block_stub(x1)

    # graph branch: bilinear resize to 16x16, then two Blocks
    x2 = bilinear_resize(x, (16, 16))                     # (B, 16, 16, 64)
    x2 = block_stub(x2)
    x2 = block_stub(x2)

    # fused pools + concat + fc1 + lrelu + BN1d + fc2 + lrelu
    # feature order matches torch.cat((x_9, x_10, x_5)) = [x2_avg|x2_max|x1_avg|x1_max]
    out = pool_head(x1, x2, params["fc1_w"], params["fc1_b"],
                    params["bnf1_g"], params["bnf1_b"],
                    params["fc2_w"], params["fc2_b"])     # (B, num_classes)
    return out, out                                       # torch returns (x, x)


def init_params(key, input_channels, num_classes):
    ks = jax.random.split(key, 6)
    return {
        "conv_w": jax.random.normal(ks[0], (3, 3, input_channels, 64), jnp.float32) * 0.1,
        "conv_b": jax.random.normal(ks[1], (1, 64), jnp.float32) * 0.01,
        "bn1_g": jnp.ones((1, 64), jnp.float32),
        "bn1_b": jnp.zeros((1, 64), jnp.float32),
        "fc1_w": jax.random.normal(ks[2], (256, 64), jnp.float32) * 0.05,
        "fc1_b": jax.random.normal(ks[3], (1, 64), jnp.float32) * 0.01,
        "bnf1_g": jnp.ones((1, 64), jnp.float32),
        "bnf1_b": jnp.zeros((1, 64), jnp.float32),
        "fc2_w": jax.random.normal(ks[4], (64, num_classes), jnp.float32) * 0.05,
        "fc2_b": jax.random.normal(ks[5], (1, num_classes), jnp.float32) * 0.01,
    }


if __name__ == "__main__":
    input_channels = 4
    num_nodes = 4          # num_heads of the (undefined) TransformerBlock
    num_classes = 10
    B, H, W = 2, 8, 8      # patch_size = 8

    key = jax.random.PRNGKey(0)
    k_x, k_p = jax.random.split(key)
    x = jax.random.normal(k_x, (B, input_channels, H, W), jnp.float32)  # NCHW like PyTorch
    params = init_params(k_p, input_channels, num_classes)

    fwd = jax.jit(dgg_forward)
    out, out2 = fwd(x, params)
    jax.block_until_ready(out)
    assert out.shape == (B, num_classes)
    assert bool(jnp.all(jnp.isfinite(out)))
    print("KERNEL_OK")
</pallas_src>

<mosaic_0001>
module attributes {stable_mosaic.version = 11 : i64} {
  func.func @_conv_bn_kernel(%arg0: i32, %arg1: memref<128x36xf32, #tpu.memory_space<vmem>>, %arg2: memref<36x64xf32, #tpu.memory_space<vmem>>, %arg3: memref<1x64xf32, #tpu.memory_space<vmem>>, %arg4: memref<1x64xf32, #tpu.memory_space<vmem>>, %arg5: memref<1x64xf32, #tpu.memory_space<vmem>>, %arg6: memref<128x64xf32, #tpu.memory_space<vmem>>) attributes {dimension_semantics = [#tpu.dimension_semantics<arbitrary>], iteration_bounds = array<i64: 1>, scalar_prefetch = 0 : i64, scratch_operands = 0 : i64, tpu.core_type = #tpu.core_type<tc>, window_params = [{pipeline_mode = #tpu.pipeline_mode<synchronous>, transform_indices = @transform_0, window_bounds = array<i64: 128, 36>}, {pipeline_mode = #tpu.pipeline_mode<synchronous>, transform_indices = @transform_1, window_bounds = array<i64: 36, 64>}, {pipeline_mode = #tpu.pipeline_mode<synchronous>, transform_indices = @transform_2, window_bounds = array<i64: 1, 64>}, {pipeline_mode = #tpu.pipeline_mode<synchronous>, transform_indices = @transform_3, window_bounds = array<i64: 1, 64>}, {pipeline_mode = #tpu.pipeline_mode<synchronous>, transform_indices = @transform_4, window_bounds = array<i64: 1, 64>}, {pipeline_mode = #tpu.pipeline_mode<synchronous>, transform_indices = @transform_5, window_bounds = array<i64: 128, 64>}]} {
    %c0 = arith.constant 0 : index
    %c0_0 = arith.constant 0 : index
    %0 = vector.load %arg1[%c0, %c0_0] : memref<128x36xf32, #tpu.memory_space<vmem>>, vector<128x36xf32>
    %1 = arith.truncf %0 : vector<128x36xf32> to vector<128x36xbf16>
    %c0_1 = arith.constant 0 : index
    %c0_2 = arith.constant 0 : index
    %2 = vector.load %arg2[%c0_1, %c0_2] : memref<36x64xf32, #tpu.memory_space<vmem>>, vector<36x64xf32>
    %3 = arith.truncf %2 : vector<36x64xf32> to vector<36x64xbf16>
    %cst = arith.constant dense<0.000000e+00> : vector<128x64xf32>
    %4 = tpu.matmul %1, %3, %cst {dimension_numbers = #tpu.dot_dimension_numbers<[1], [0], [0], [1], [0, 0, 1, 1], [], []>} : vector<128x36xbf16>, vector<36x64xbf16>, vector<128x64xf32> -> vector<128x64xf32>
    %c0_3 = arith.constant 0 : index
    %c0_4 = arith.constant 0 : index
    %5 = vector.load %arg3[%c0_3, %c0_4] : memref<1x64xf32, #tpu.memory_space<vmem>>, vector<1x64xf32>
    %6 = vector.broadcast %5 : vector<1x64xf32> to vector<128x64xf32>
    %7 = arith.addf %4, %6 : vector<128x64xf32>
    %cst_5 = arith.constant 0.000000e+00 : f32
    %8 = vector.broadcast %cst_5 : f32 to vector<128x64xf32>
    %9 = arith.cmpf oge, %7, %8 : vector<128x64xf32>
    %cst_6 = arith.constant 0.00999999977 : f32
    %10 = vector.broadcast %cst_6 : f32 to vector<128x64xf32>
    %11 = arith.mulf %10, %7 : vector<128x64xf32>
    %12 = arith.select %9, %7, %11 : vector<128x64xi1>, vector<128x64xf32>
    %cst_7 = arith.constant dense<0.000000e+00> : vector<64xf32>
    %13 = vector.multi_reduction <add>, %12, %cst_7 [0] : vector<128x64xf32> to vector<64xf32>
    %14 = vector.shape_cast %13 : vector<64xf32> to vector<1x64xf32>
    %cst_8 = arith.constant 1.280000e+02 : f32
    %15 = vector.broadcast %cst_8 : f32 to vector<1x64xf32>
    %16 = arith.divf %14, %15 : vector<1x64xf32>
    %17 = arith.mulf %12, %12 : vector<128x64xf32>
    %cst_9 = arith.constant dense<0.000000e+00> : vector<64xf32>
    %18 = vector.multi_reduction <add>, %17, %cst_9 [0] : vector<128x64xf32> to vector<64xf32>
    %19 = vector.shape_cast %18 : vector<64xf32> to vector<1x64xf32>
    %cst_10 = arith.constant 1.280000e+02 : f32
    %20 = vector.broadcast %cst_10 : f32 to vector<1x64xf32>
    %21 = arith.divf %19, %20 : vector<1x64xf32>
    %22 = arith.mulf %16, %16 : vector<1x64xf32>
    %23 = arith.subf %21, %22 : vector<1x64xf32>
    %cst_11 = arith.constant 0.000000e+00 : f32
    %24 = vector.broadcast %cst_11 : f32 to vector<1x64xf32>
    %25 = arith.maximumf %23, %24 : vector<1x64xf32>
    %26 = vector.broadcast %16 : vector<1x64xf32> to vector<128x64xf32>
    %27 = arith.subf %12, %26 : vector<128x64xf32>
    %cst_12 = arith.constant 9.99999974E-6 : f32
    %28 = vector.broadcast %cst_12 : f32 to vector<1x64xf32>
    %29 = arith.addf %25, %28 : vector<1x64xf32>
    %30 = math.rsqrt %29 : vector<1x64xf32>
    %31 = vector.broadcast %30 : vector<1x64xf32> to vector<128x64xf32>
    %32 = arith.mulf %27, %31 : vector<128x64xf32>
    %c0_13 = arith.constant 0 : index
    %c0_14 = arith.constant 0 : index
    %33 = vector.load %arg4[%c0_13, %c0_14] : memref<1x64xf32, #tpu.memory_space<vmem>>, vector<1x64xf32>
    %34 = vector.broadcast %33 : vector<1x64xf32> to vector<128x64xf32>
    %35 = arith.mulf %32, %34 : vector<128x64xf32>
    %c0_15 = arith.constant 0 : index
    %c0_16 = arith.constant 0 : index
    %36 = vector.load %arg5[%c0_15, %c0_16] : memref<1x64xf32, #tpu.memory_space<vmem>>, vector<1x64xf32>
    %37 = vector.broadcast %36 : vector<1x64xf32> to vector<128x64xf32>
    %38 = arith.addf %35, %37 : vector<128x64xf32>
    %c0_17 = arith.constant 0 : index
    %c0_18 = arith.constant 0 : index
    %39 = vector.load %arg6[%c0_17, %c0_18] : memref<128x64xf32, #tpu.memory_space<vmem>>, vector<128x64xf32>
    tpu.vector_store %arg6[%c0_17, %c0_18], %38 {strides = array<i32>} : memref<128x64xf32, #tpu.memory_space<vmem>>, vector<128x64xf32>,
    return
  }
  func.func @transform_0(%arg0: i32) -> (i32, i32) {
    %c0_i32 = arith.constant 0 : i32
    %c0_i32_0 = arith.constant 0 : i32
    %c0_i32_1 = arith.constant 0 : i32
    return %c0_i32, %c0_i32_0 : i32, i32
  }
  func.func @transform_1(%arg0: i32) -> (i32, i32) {
    %c0_i32 = arith.constant 0 : i32
    %c0_i32_0 = arith.constant 0 : i32
    %c0_i32_1 = arith.constant 0 : i32
    return %c0_i32, %c0_i32_0 : i32, i32
  }
  func.func @transform_2(%arg0: i32) -> (i32, i32) {
    %c0_i32 = arith.constant 0 : i32
    %c0_i32_0 = arith.constant 0 : i32
    %c0_i32_1 = arith.constant 0 : i32
    return %c0_i32, %c0_i32_0 : i32, i32
  }
  func.func @transform_3(%arg0: i32) -> (i32, i32) {
    %c0_i32 = arith.constant 0 : i32
    %c0_i32_0 = arith.constant 0 : i32
    %c0_i32_1 = arith.constant 0 : i32
    return %c0_i32, %c0_i32_0 : i32, i32
  }
  func.func @transform_4(%arg0: i32) -> (i32, i32) {
    %c0_i32 = arith.constant 0 : i32
    %c0_i32_0 = arith.constant 0 : i32
    %c0_i32_1 = arith.constant 0 : i32
    return %c0_i32, %c0_i32_0 : i32, i32
  }
  func.func @transform_5(%arg0: i32) -> (i32, i32) {
    %c0_i32 = arith.constant 0 : i32
    %c0_i32_0 = arith.constant 0 : i32
    %c0_i32_1 = arith.constant 0 : i32
    return %c0_i32, %c0_i32_0 : i32, i32
  }
}

module attributes {stable_mosaic.version = 11 : i64} {
  func.func @_interp_kernel(%arg0: i32, %arg1: memref<256x64xf32, #tpu.memory_space<vmem>>, %arg2: memref<64x128xf32, #tpu.memory_space<vmem>>, %arg3: memref<256x128xf32, #tpu.memory_space<vmem>>) attributes {dimension_semantics = [#tpu.dimension_semantics<arbitrary>], iteration_bounds = array<i64: 1>, scalar_prefetch = 0 : i64, scratch_operands = 0 : i64, tpu.core_type = #tpu.core_type<tc>, window_params = [{pipeline_mode = #tpu.pipeline_mode<synchronous>, transform_indices = @transform_0, window_bounds = array<i64: 256, 64>}, {pipeline_mode = #tpu.pipeline_mode<synchronous>, transform_indices = @transform_1, window_bounds = array<i64: 64, 128>}, {pipeline_mode = #tpu.pipeline_mode<synchronous>, transform_indices = @transform_2, window_bounds = array<i64: 256, 128>}]} {
    %c0 = arith.constant 0 : index
    %c0_0 = arith.constant 0 : index
    %0 = vector.load %arg1[%c0, %c0_0] : memref<256x64xf32, #tpu.memory_space<vmem>>, vector<256x64xf32>
    %1 = arith.truncf %0 : vector<256x64xf32> to vector<256x64xbf16>
    %c0_1 = arith.constant 0 : index
    %c0_2 = arith.constant 0 : index
    %2 = vector.load %arg2[%c0_1, %c0_2] : memref<64x128xf32, #tpu.memory_space<vmem>>, vector<64x128xf32>
    %3 = arith.truncf %2 : vector<64x128xf32> to vector<64x128xbf16>
    %cst = arith.constant dense<0.000000e+00> : vector<256x128xf32>
    %4 = tpu.matmul %1, %3, %cst {dimension_numbers = #tpu.dot_dimension_numbers<[1], [0], [0], [1], [0, 0, 1, 1], [], []>} : vector<256x64xbf16>, vector<64x128xbf16>, vector<256x128xf32> -> vector<256x128xf32>
    %c0_3 = arith.constant 0 : index
    %c0_4 = arith.constant 0 : index
    %5 = vector.load %arg3[%c0_3, %c0_4] : memref<256x128xf32, #tpu.memory_space<vmem>>, vector<256x128xf32>
    tpu.vector_store %arg3[%c0_3, %c0_4], %4 {strides = array<i32>} : memref<256x128xf32, #tpu.memory_space<vmem>>, vector<256x128xf32>,
    return
  }
  func.func @transform_0(%arg0: i32) -> (i32, i32) {
    %c0_i32 = arith.constant 0 : i32
    %c0_i32_0 = arith.constant 0 : i32
    %c0_i32_1 = arith.constant 0 : i32
    return %c0_i32, %c0_i32_0 : i32, i32
  }
  func.func @transform_1(%arg0: i32) -> (i32, i32) {
    %c0_i32 = arith.constant 0 : i32
    %c0_i32_0 = arith.constant 0 : i32
    %c0_i32_1 = arith.constant 0 : i32
    return %c0_i32, %c0_i32_0 : i32, i32
  }
  func.func @transform_2(%arg0: i32) -> (i32, i32) {
    %c0_i32 = arith.constant 0 : i32
    %c0_i32_0 = arith.constant 0 : i32
    %c0_i32_1 = arith.constant 0 : i32
    return %c0_i32, %c0_i32_0 : i32, i32
  }
}

module attributes {stable_mosaic.version = 11 : i64} {
  func.func @_pool_head_kernel(%arg0: i32, %arg1: memref<2x64x64xf32, #tpu.memory_space<vmem>>, %arg2: memref<2x256x64xf32, #tpu.memory_space<vmem>>, %arg3: memref<256x64xf32, #tpu.memory_space<vmem>>, %arg4: memref<1x64xf32, #tpu.memory_space<vmem>>, %arg5: memref<1x64xf32, #tpu.memory_space<vmem>>, %arg6: memref<1x64xf32, #tpu.memory_space<vmem>>, %arg7: memref<64x10xf32, #tpu.memory_space<vmem>>, %arg8: memref<1x10xf32, #tpu.memory_space<vmem>>, %arg9: memref<2x10xf32, #tpu.memory_space<vmem>>) attributes {dimension_semantics = [#tpu.dimension_semantics<arbitrary>], iteration_bounds = array<i64: 1>, scalar_prefetch = 0 : i64, scratch_operands = 0 : i64, tpu.core_type = #tpu.core_type<tc>, window_params = [{pipeline_mode = #tpu.pipeline_mode<synchronous>, transform_indices = @transform_0, window_bounds = array<i64: 2, 64, 64>}, {pipeline_mode = #tpu.pipeline_mode<synchronous>, transform_indices = @transform_1, window_bounds = array<i64: 2, 256, 64>}, {pipeline_mode = #tpu.pipeline_mode<synchronous>, transform_indices = @transform_2, window_bounds = array<i64: 256, 64>}, {pipeline_mode = #tpu.pipeline_mode<synchronous>, transform_indices = @transform_3, window_bounds = array<i64: 1, 64>}, {pipeline_mode = #tpu.pipeline_mode<synchronous>, transform_indices = @transform_4, window_bounds = array<i64: 1, 64>}, {pipeline_mode = #tpu.pipeline_mode<synchronous>, transform_indices = @transform_5, window_bounds = array<i64: 1, 64>}, {pipeline_mode = #tpu.pipeline_mode<synchronous>, transform_indices = @transform_6, window_bounds = array<i64: 64, 10>}, {pipeline_mode = #tpu.pipeline_mode<synchronous>, transform_indices = @transform_7, window_bounds = array<i64: 1, 10>}, {pipeline_mode = #tpu.pipeline_mode<synchronous>, transform_indices = @transform_8, window_bounds = array<i64: 2, 10>}]} {
    %c0 = arith.constant 0 : index
    %c0_0 = arith.constant 0 : index
    %c0_1 = arith.constant 0 : index
    %0 = vector.load %arg1[%c0, %c0_0, %c0_1] : memref<2x64x64xf32, #tpu.memory_space<vmem>>, vector<2x64x64xf32>
    %c0_2 = arith.constant 0 : index
    %c0_3 = arith.constant 0 : index
    %c0_4 = arith.constant 0 : index
    %1 = vector.load %arg2[%c0_2, %c0_3, %c0_4] : memref<2x256x64xf32, #tpu.memory_space<vmem>>, vector<2x256x64xf32>
    %cst = arith.constant dense<0.000000e+00> : vector<2x64xf32>
    %2 = vector.multi_reduction <add>, %0, %cst [1] : vector<2x64x64xf32> to vector<2x64xf32>
    %cst_5 = arith.constant 6.400000e+01 : f32
    %3 = vector.broadcast %cst_5 : f32 to vector<2x64xf32>
    %4 = arith.divf %2, %3 : vector<2x64xf32>
    %cst_6 = arith.constant dense<0xFF800000> : vector<2x64xf32>
    %5 = vector.multi_reduction <maximumf>, %0, %cst_6 [1] : vector<2x64x64xf32> to vector<2x64xf32>
    %cst_7 = arith.constant dense<0.000000e+00> : vector<2x64xf32>
    %6 = vector.multi_reduction <add>, %1, %cst_7 [1] : vector<2x256x64xf32> to vector<2x64xf32>
    %cst_8 = arith.constant 2.560000e+02 : f32
    %7 = vector.broadcast %cst_8 : f32 to vector<2x64xf32>
    %8 = arith.divf %6, %7 : vector<2x64xf32>
    %cst_9 = arith.constant dense<0xFF800000> : vector<2x64xf32>
    %9 = vector.multi_reduction <maximumf>, %1, %cst_9 [1] : vector<2x256x64xf32> to vector<2x64xf32>
    %c0_10 = arith.constant 0 : index
    %c0_11 = arith.constant 0 : index
    %10 = vector.load %arg3[%c0_10, %c0_11] : memref<256x64xf32, #tpu.memory_space<vmem>>, vector<256x64xf32>
    %11 = vector.extract_strided_slice %10 {offsets = [0, 0], sizes = [64, 64], strides = [1, 1]} : vector<256x64xf32> to vector<64x64xf32>
    %cst_12 = arith.constant dense<0.000000e+00> : vector<2x64xf32>
    %12 = tpu.matmul %8, %11, %cst_12 {dimension_numbers = #tpu.dot_dimension_numbers<[1], [0], [0], [1], [0, 0, 1, 1], [], []>} : vector<2x64xf32>, vector<64x64xf32>, vector<2x64xf32> -> vector<2x64xf32>
    %13 = vector.extract_strided_slice %10 {offsets = [64, 0], sizes = [64, 64], strides = [1, 1]} : vector<256x64xf32> to vector<64x64xf32>
    %cst_13 = arith.constant dense<0.000000e+00> : vector<2x64xf32>
    %14 = tpu.matmul %9, %13, %cst_13 {dimension_numbers = #tpu.dot_dimension_numbers<[1], [0], [0], [1], [0, 0, 1, 1], [], []>} : vector<2x64xf32>, vector<64x64xf32>, vector<2x64xf32> -> vector<2x64xf32>
    %15 = arith.addf %12, %14 : vector<2x64xf32>
    %16 = vector.extract_strided_slice %10 {offsets = [128, 0], sizes = [64, 64], strides = [1, 1]} : vector<256x64xf32> to vector<64x64xf32>
    %cst_14 = arith.constant dense<0.000000e+00> : vector<2x64xf32>
    %17 = tpu.matmul %4, %16, %cst_14 {dimension_numbers = #tpu.dot_dimension_numbers<[1], [0], [0], [1], [0, 0, 1, 1], [], []>} : vector<2x64xf32>, vector<64x64xf32>, vector<2x64xf32> -> vector<2x64xf32>
    %18 = arith.addf %15, %17 : vector<2x64xf32>
    %19 = vector.extract_strided_slice %10 {offsets = [192, 0], sizes = [64, 64], strides = [1, 1]} : vector<256x64xf32> to vector<64x64xf32>
    %cst_15 = arith.constant dense<0.000000e+00> : vector<2x64xf32>
    %20 = tpu.matmul %5, %19, %cst_15 {dimension_numbers = #tpu.dot_dimension_numbers<[1], [0], [0], [1], [0, 0, 1, 1], [], []>} : vector<2x64xf32>, vector<64x64xf32>, vector<2x64xf32> -> vector<2x64xf32>
    %21 = arith.addf %18, %20 : vector<2x64xf32>
    %c0_16 = arith.constant 0 : index
    %c0_17 = arith.constant 0 : index
    %22 = vector.load %arg4[%c0_16, %c0_17] : memref<1x64xf32, #tpu.memory_space<vmem>>, vector<1x64xf32>
    %23 = vector.broadcast %22 : vector<1x64xf32> to vector<2x64xf32>
    %24 = arith.addf %21, %23 : vector<2x64xf32>
    %cst_18 = arith.constant 0.000000e+00 : f32
    %25 = vector.broadcast %cst_18 : f32 to vector<2x64xf32>
    %26 = arith.cmpf oge, %24, %25 : vector<2x64xf32>
    %cst_19 = arith.constant 0.00999999977 : f32
    %27 = vector.broadcast %cst_19 : f32 to vector<2x64xf32>
    %28 = arith.mulf %27, %24 : vector<2x64xf32>
    %29 = arith.select %26, %24, %28 : vector<2x64xi1>, vector<2x64xf32>
    %cst_20 = arith.constant dense<0.000000e+00> : vector<64xf32>
    %30 = vector.multi_reduction <add>, %29, %cst_20 [0] : vector<2x64xf32> to vector<64xf32>
    %31 = vector.shape_cast %30 : vector<64xf32> to vector<1x64xf32>
    %cst_21 = arith.constant 2.000000e+00 : f32
    %32 = vector.broadcast %cst_21 : f32 to vector<1x64xf32>
    %33 = arith.divf %31, %32 : vector<1x64xf32>
    %34 = arith.mulf %29, %29 : vector<2x64xf32>
    %cst_22 = arith.constant dense<0.000000e+00> : vector<64xf32>
    %35 = vector.multi_reduction <add>, %34, %cst_22 [0] : vector<2x64xf32> to vector<64xf32>
    %36 = vector.shape_cast %35 : vector<64xf32> to vector<1x64xf32>
    %cst_23 = arith.constant 2.000000e+00 : f32
    %37 = vector.broadcast %cst_23 : f32 to vector<1x64xf32>
    %38 = arith.divf %36, %37 : vector<1x64xf32>
    %39 = arith.mulf %33, %33 : vector<1x64xf32>
    %40 = arith.subf %38, %39 : vector<1x64xf32>
    %cst_24 = arith.constant 0.000000e+00 : f32
    %41 = vector.broadcast %cst_24 : f32 to vector<1x64xf32>
    %42 = arith.maximumf %40, %41 : vector<1x64xf32>
    %43 = vector.broadcast %33 : vector<1x64xf32> to vector<2x64xf32>
    %44 = arith.subf %29, %43 : vector<2x64xf32>
    %cst_25 = arith.constant 9.99999974E-6 : f32
    %45 = vector.broadcast %cst_25 : f32 to vector<1x64xf32>
    %46 = arith.addf %42, %45 : vector<1x64xf32>
    %47 = math.rsqrt %46 : vector<1x64xf32>
    %48 = vector.broadcast %47 : vector<1x64xf32> to vector<2x64xf32>
    %49 = arith.mulf %44, %48 : vector<2x64xf32>
    %c0_26 = arith.constant 0 : index
    %c0_27 = arith.constant 0 : index
    %50 = vector.load %arg5[%c0_26, %c0_27] : memref<1x64xf32, #tpu.memory_space<vmem>>, vector<1x64xf32>
    %51 = vector.broadcast %50 : vector<1x64xf32> to vector<2x64xf32>
    %52 = arith.mulf %49, %51 : vector<2x64xf32>
    %c0_28 = arith.constant 0 : index
    %c0_29 = arith.constant 0 : index
    %53 = vector.load %arg6[%c0_28, %c0_29] : memref<1x64xf32, #tpu.memory_space<vmem>>, vector<1x64xf32>
    %54 = vector.broadcast %53 : vector<1x64xf32> to vector<2x64xf32>
    %55 = arith.addf %52, %54 : vector<2x64xf32>
    %c0_30 = arith.constant 0 : index
    %c0_31 = arith.constant 0 : index
    %56 = vector.load %arg7[%c0_30, %c0_31] : memref<64x10xf32, #tpu.memory_space<vmem>>, vector<64x10xf32>
    %cst_32 = arith.constant dense<0.000000e+00> : vector<2x10xf32>
    %57 = tpu.matmul %55, %56, %cst_32 {dimension_numbers = #tpu.dot_dimension_numbers<[1], [0], [0], [1], [0, 0, 1, 1], [], []>} : vector<2x64xf32>, vector<64x10xf32>, vector<2x10xf32> -> vector<2x10xf32>
    %c0_33 = arith.constant 0 : index
    %c0_34 = arith.constant 0 : index
    %58 = vector.load %arg8[%c0_33, %c0_34] : memref<1x10xf32, #tpu.memory_space<vmem>>, vector<1x10xf32>
    %59 = vector.broadcast %58 : vector<1x10xf32> to vector<2x10xf32>
    %60 = arith.addf %57, %59 : vector<2x10xf32>
    %cst_35 = arith.constant 0.000000e+00 : f32
    %61 = vector.broadcast %cst_35 : f32 to vector<2x10xf32>
    %62 = arith.cmpf oge, %60, %61 : vector<2x10xf32>
    %cst_36 = arith.constant 0.00999999977 : f32
    %63 = vector.broadcast %cst_36 : f32 to vector<2x10xf32>
    %64 = arith.mulf %63, %60 : vector<2x10xf32>
    %65 = arith.select %62, %60, %64 : vector<2x10xi1>, vector<2x10xf32>
    %c0_37 = arith.constant 0 : index
    %c0_38 = arith.constant 0 : index
    %66 = vector.load %arg9[%c0_37, %c0_38] : memref<2x10xf32, #tpu.memory_space<vmem>>, vector<2x10xf32>
    tpu.vector_store %arg9[%c0_37, %c0_38], %65 {strides = array<i32>} : memref<2x10xf32, #tpu.memory_space<vmem>>, vector<2x10xf32>,
    return
  }
  func.func @transform_0(%arg0: i32) -> (i32, i32, i32) {
    %c0_i32 = arith.constant 0 : i32
    %c0_i32_0 = arith.constant 0 : i32
    %c0_i32_1 = arith.constant 0 : i32
    %c0_i32_2 = arith.constant 0 : i32
    return %c0_i32, %c0_i32_0, %c0_i32_1 : i32, i32, i32
  }
  func.func @transform_1(%arg0: i32) -> (i32, i32, i32) {
    %c0_i32 = arith.constant 0 : i32
    %c0_i32_0 = arith.constant 0 : i32
    %c0_i32_1 = arith.constant 0 : i32
    %c0_i32_2 = arith.constant 0 : i32
    return %c0_i32, %c0_i32_0, %c0_i32_1 : i32, i32, i32
  }
  func.func @transform_2(%arg0: i32) -> (i32, i32) {
    %c0_i32 = arith.constant 0 : i32
    %c0_i32_0 = arith.constant 0 : i32
    %c0_i32_1 = arith.constant 0 : i32
    return %c0_i32, %c0_i32_0 : i32, i32
  }
  func.func @transform_3(%arg0: i32) -> (i32, i32) {
    %c0_i32 = arith.constant 0 : i32
    %c0_i32_0 = arith.constant 0 : i32
    %c0_i32_1 = arith.constant 0 : i32
    return %c0_i32, %c0_i32_0 : i32, i32
  }
  func.func @transform_4(%arg0: i32) -> (i32, i32) {
    %c0_i32 = arith.constant 0 : i32
    %c0_i32_0 = arith.constant 0 : i32
    %c0_i32_1 = arith.constant 0 : i32
    return %c0_i32, %c0_i32_0 : i32, i32
  }
  func.func @transform_5(%arg0: i32) -> (i32, i32) {
    %c0_i32 = arith.constant 0 : i32
    %c0_i32_0 = arith.constant 0 : i32
    %c0_i32_1 = arith.constant 0 : i32
    return %c0_i32, %c0_i32_0 : i32, i32
  }
  func.func @transform_6(%arg0: i32) -> (i32, i32) {
    %c0_i32 = arith.constant 0 : i32
    %c0_i32_0 = arith.constant 0 : i32
    %c0_i32_1 = arith.constant 0 : i32
    return %c0_i32, %c0_i32_0 : i32, i32
  }
  func.func @transform_7(%arg0: i32) -> (i32, i32) {
    %c0_i32 = arith.constant 0 : i32
    %c0_i32_0 = arith.constant 0 : i32
    %c0_i32_1 = arith.constant 0 : i32
    return %c0_i32, %c0_i32_0 : i32, i32
  }
  func.func @transform_8(%arg0: i32) -> (i32, i32) {
    %c0_i32 = arith.constant 0 : i32
    %c0_i32_0 = arith.constant 0 : i32
    %c0_i32_1 = arith.constant 0 : i32
    return %c0_i32, %c0_i32_0 : i32, i32
  }
}

</mosaic_0001>

<llo_original>
// kernel: dgg_forward.4
$region0: #{dgg_forward.4}
  #allocation0 [shape = 'u32[]', space=smem, size = 0x4, offset = 0x4, fixed_abs, tag = 'smem constant byte address 0x4 - core index']
  #allocation1 [shape = 'u32[72,128]{1,0:T(1,128)}', space=vmem, size = 0x9000, scoped, tag = 'internal scratch']
  %s0 = inlined_call_operand.vmem [shape: f32[256,64], index: 0, kind: input, shape index: {}]
  %s1 = inlined_call_operand.vmem [shape: f32[64,128], index: 1, kind: input, shape index: {}]
  %s2 = inlined_call_operand.vmem [shape: f32[256,128], index: 2, kind: output, shape index: {}]
  %s3 = sld [smem:[#allocation0]]
  $region18: #{dgg_forward.4} parent=0
    _
  %s5 = ssub.s32 1, %s3
  %s6 = scalar_select 0, %s5, %s3
  // Predicated region
  $region2: #{dgg_forward.4} parent=0 // pred_check
    _
  $region3: #{dgg_forward.4} parent=0 // pred_check_branch
    %8 = sbr.rel (0) target = $region5
  $region4: #{dgg_forward.4} parent=0 // pred_region
    _
  $region5: #{dgg_forward.4} parent=0 // pred_fallthru
    _
  // Predicated region
  $region6: #{dgg_forward.4} parent=0 // pred_check
    _
  $region7: #{dgg_forward.4} parent=0 // pred_check_branch
    %10 = sbr.rel (0) target = $region9
  $region8: #{dgg_forward.4} parent=0 // pred_region
    _
  $region9: #{dgg_forward.4} parent=0 // pred_fallthru
    _
  %v12 = vld [vmem:[%s0] sm:$0xff]
  %v13 = vld [vmem:[%s0 + $0x8] sm:$0xff]
  %v14 = vld [vmem:[%s0 + $0x10] sm:$0xff]
  %v15 = vld [vmem:[%s0 + $0x18] sm:$0xff]
  %v16 = vld [vmem:[%s0 + $0x20] sm:$0xff]
  %v17 = vld [vmem:[%s0 + $0x28] sm:$0xff]
  %v18 = vld [vmem:[%s0 + $0x30] sm:$0xff]
  %v19 = vld [vmem:[%s0 + $0x38] sm:$0xff]
  %v20 = vld [vmem:[%s0 + $0x40] sm:$0xff]
  %v21 = vld [vmem:[%s0 + $0x48] sm:$0xff]
  %v22 = vld [vmem:[%s0 + $0x50] sm:$0xff]
  %v23 = vld [vmem:[%s0 + $0x58] sm:$0xff]
  %v24 = vld [vmem:[%s0 + $0x60] sm:$0xff]
  %v25 = vld [vmem:[%s0 + $0x68] sm:$0xff]
  %v26 = vld [vmem:[%s0 + $0x70] sm:$0xff]
  %v27 = vld [vmem:[%s0 + $0x78] sm:$0xff]
  %v28 = vld [vmem:[%s0 + $0x80] sm:$0xff]
  %v29 = vld [vmem:[%s0 + $0x88] sm:$0xff]
  %v30 = vld [vmem:[%s0 + $0x90] sm:$0xff]
  %v31 = vld [vmem:[%s0 + $0x98] sm:$0xff]
  %v32 = vld [vmem:[%s0 + $0xa0] sm:$0xff]
  %v33 = vld [vmem:[%s0 + $0xa8] sm:$0xff]
  %v34 = vld [vmem:[%s0 + $0xb0] sm:$0xff]
  %v35 = vld [vmem:[%s0 + $0xb8] sm:$0xff]
  %v36 = vld [vmem:[%s0 + $0xc0] sm:$0xff]
  %v37 = vld [vmem:[%s0 + $0xc8] sm:$0xff]
  %v38 = vld [vmem:[%s0 + $0xd0] sm:$0xff]
  %v39 = vld [vmem:[%s0 + $0xd8] sm:$0xff]
  %v40 = vld [vmem:[%s0 + $0xe0] sm:$0xff]
  %v41 = vld [vmem:[%s0 + $0xe8] sm:$0xff]
  %v42 = vld [vmem:[%s0 + $0xf0] sm:$0xff]
  %v43 = vld [vmem:[%s0 + $0xf8] sm:$0xff]
  %v44 = vpack.c.bf16 %v13, %v12
  %v45 = vpack.c.bf16 %v15, %v14
  %v46 = vpack.c.bf16 %v17, %v16
  %v47 = vpack.c.bf16 %v19, %v18
  %v48 = vpack.c.bf16 %v21, %v20
  %v49 = vpack.c.bf16 %v23, %v22
  %v50 = vpack.c.bf16 %v25, %v24
  %v51 = vpack.c.bf16 %v27, %v26
  %v52 = vpack.c.bf16 %v29, %v28
  %v53 = vpack.c.bf16 %v31, %v30
  %v54 = vpack.c.bf16 %v33, %v32
  %v55 = vpack.c.bf16 %v35, %v34
  %v56 = vpack.c.bf16 %v37, %v36
  %v57 = vpack.c.bf16 %v39, %v38
  %v58 = vpack.c.bf16 %v41, %v40
  %v59 = vpack.c.bf16 %v43, %v42
  %v60 = vld [vmem:[%s1] sm:$0xff]
  %v61 = vld [vmem:[%s1 + $0x8] sm:$0xff]
  %v62 = vld [vmem:[%s1 + $0x10] sm:$0xff]
  %v63 = vld [vmem:[%s1 + $0x18] sm:$0xff]
  %v64 = vld [vmem:[%s1 + $0x20] sm:$0xff]
  %v65 = vld [vmem:[%s1 + $0x28] sm:$0xff]
  %v66 = vld [vmem:[%s1 + $0x30] sm:$0xff]
  %v67 = vld [vmem:[%s1 + $0x38] sm:$0xff]
  %v68 = vpack.c.bf16 %v61, %v60
  %v69 = vpack.c.bf16 %v63, %v62
  %v70 = vpack.c.bf16 %v65, %v64
  %v71 = vpack.c.bf16 %v67, %v66
  %vm72 = vcmask 523264
  %v74 = vsel %vm72, %v44, 0
  %v77 = vsel %vm72, %v45, 0
  %v80 = vsel %vm72, %v46, 0
  %v83 = vsel %vm72, %v47, 0
  %v86 = vsel %vm72, %v48, 0
  %v89 = vsel %vm72, %v49, 0
  %v92 = vsel %vm72, %v50, 0
  %v95 = vsel %vm72, %v51, 0
  %v98 = vsel %vm72, %v52, 0
  %v101 = vsel %vm72, %v53, 0
  %v104 = vsel %vm72, %v54, 0
  %v107 = vsel %vm72, %v55, 0
  %v110 = vsel %vm72, %v56, 0
  %v113 = vsel %vm72, %v57, 0
  %v116 = vsel %vm72, %v58, 0
  %v119 = vsel %vm72, %v59, 0
  %121 = vmatpush.bf16.msra.mxu0 0
  %122 = vmatpush.bf16.msra.mxu0 0
  %123 = vmatpush.bf16.msra.mxu0 0
  %124 = vmatpush.bf16.msra.mxu0 0
  %125 = vmatpush.bf16.msra.mxu0 %v71
  %126 = vmatpush.bf16.msra.mxu0 %v70
  %127 = vmatpush.bf16.msra.mxu0 %v69
  %128 = vmatpush.bf16.msra.mxu0 %v68
  %129 = vmatmul.bf16.gmra.mxu0 %v74
  %v130 = vpop.f32.mrf.mxu0
  %v131 = vadd.f32 0.0, %v130
  %v132 = vpop.f32.mrf.mxu0
  %v133 = vadd.f32 0.0, %v132
  %134 = vmatmul.bf16.gmra.mxu0 %v77
  %v135 = vpop.f32.mrf.mxu0
  %v136 = vadd.f32 0.0, %v135
  %v137 = vpop.f32.mrf.mxu0
  %v138 = vadd.f32 0.0, %v137
  %139 = vmatmul.bf16.gmra.mxu0 %v80
  %v140 = vpop.f32.mrf.mxu0
  %v141 = vadd.f32 0.0, %v140
  %v142 = vpop.f32.mrf.mxu0
  %v143 = vadd.f32 0.0, %v142
  %144 = vmatmul.bf16.gmra.mxu0 %v83
  %v145 = vpop.f32.mrf.mxu0
  %v146 = vadd.f32 0.0, %v145
  %v147 = vpop.f32.mrf.mxu0
  %v148 = vadd.f32 0.0, %v147
  %149 = vmatmul.bf16.gmra.mxu0 %v86
  %v150 = vpop.f32.mrf.mxu0
  %v151 = vadd.f32 0.0, %v150
  %v152 = vpop.f32.mrf.mxu0
  %v153 = vadd.f32 0.0, %v152
  %154 = vmatmul.bf16.gmra.mxu0 %v89
  %v155 = vpop.f32.mrf.mxu0
  %v156 = vadd.f32 0.0, %v155
  %v157 = vpop.f32.mrf.mxu0
  %v158 = vadd.f32 0.0, %v157
  %159 = vmatmul.bf16.gmra.mxu0 %v92
  %v160 = vpop.f32.mrf.mxu0
  %v161 = vadd.f32 0.0, %v160
  %v162 = vpop.f32.mrf.mxu0
  %v163 = vadd.f32 0.0, %v162
  %164 = vmatmul.bf16.gmra.mxu0 %v95
  %v165 = vpop.f32.mrf.mxu0
  %v166 = vadd.f32 0.0, %v165
  %v167 = vpop.f32.mrf.mxu0
  %v168 = vadd.f32 0.0, %v167
  %169 = vmatmul.bf16.gmra.mxu0 %v98
  %v170 = vpop.f32.mrf.mxu0
  %v171 = vadd.f32 0.0, %v170
  %v172 = vpop.f32.mrf.mxu0
  %v173 = vadd.f32 0.0, %v172
  %174 = vmatmul.bf16.gmra.mxu0 %v101
  %v175 = vpop.f32.mrf.mxu0
  %v176 = vadd.f32 0.0, %v175
  %v177 = vpop.f32.mrf.mxu0
  %v178 = vadd.f32 0.0, %v177
  %179 = vmatmul.bf16.gmra.mxu0 %v104
  %v180 = vpop.f32.mrf.mxu0
  %v181 = vadd.f32 0.0, %v180
  %v182 = vpop.f32.mrf.mxu0
  %v183 = vadd.f32 0.0, %v182
  %184 = vmatmul.bf16.gmra.mxu0 %v107
  %v185 = vpop.f32.mrf.mxu0
  %v186 = vadd.f32 0.0, %v185
  %v187 = vpop.f32.mrf.mxu0
  %v188 = vadd.f32 0.0, %v187
  %189 = vmatmul.bf16.gmra.mxu0 %v110
  %v190 = vpop.f32.mrf.mxu0
  %v191 = vadd.f32 0.0, %v190
  %v192 = vpop.f32.mrf.mxu0
  %v193 = vadd.f32 0.0, %v192
  %194 = vmatmul.bf16.gmra.mxu0 %v113
  %v195 = vpop.f32.mrf.mxu0
  %v196 = vadd.f32 0.0, %v195
  %v197 = vpop.f32.mrf.mxu0
  %v198 = vadd.f32 0.0, %v197
  %199 = vmatmul.bf16.gmra.mxu0 %v116
  %v200 = vpop.f32.mrf.mxu0
  %v201 = vadd.f32 0.0, %v200
  %v202 = vpop.f32.mrf.mxu0
  %v203 = vadd.f32 0.0, %v202
  %204 = vmatmul.bf16.gmra.mxu0 %v119
  %v205 = vpop.f32.mrf.mxu0
  %v206 = vadd.f32 0.0, %v205
  %v207 = vpop.f32.mrf.mxu0
  %v208 = vadd.f32 0.0, %v207
  %209 = vdwg.mxu0
  %210 = vst [vmem:[%s2] sm:$0xff] %v131
  %211 = vst [vmem:[%s2 + $0x8] sm:$0xff] %v133
  %212 = vst [vmem:[%s2 + $0x10] sm:$0xff] %v136
  %213 = vst [vmem:[%s2 + $0x18] sm:$0xff] %v138
  %214 = vst [vmem:[%s2 + $0x20] sm:$0xff] %v141
  %215 = vst [vmem:[%s2 + $0x28] sm:$0xff] %v143
  %216 = vst [vmem:[%s2 + $0x30] sm:$0xff] %v146
  %217 = vst [vmem:[%s2 + $0x38] sm:$0xff] %v148
  %218 = vst [vmem:[%s2 + $0x40] sm:$0xff] %v151
  %219 = vst [vmem:[%s2 + $0x48] sm:$0xff] %v153
  %220 = vst [vmem:[%s2 + $0x50] sm:$0xff] %v156
  %221 = vst [vmem:[%s2 + $0x58] sm:$0xff] %v158
  %222 = vst [vmem:[%s2 + $0x60] sm:$0xff] %v161
  %223 = vst [vmem:[%s2 + $0x68] sm:$0xff] %v163
  %224 = vst [vmem:[%s2 + $0x70] sm:$0xff] %v166
  %225 = vst [vmem:[%s2 + $0x78] sm:$0xff] %v168
  %226 = vst [vmem:[%s2 + $0x80] sm:$0xff] %v171
  %227 = vst [vmem:[%s2 + $0x88] sm:$0xff] %v173
  %228 = vst [vmem:[%s2 + $0x90] sm:$0xff] %v176
  %229 = vst [vmem:[%s2 + $0x98] sm:$0xff] %v178
  %230 = vst [vmem:[%s2 + $0xa0] sm:$0xff] %v181
  %231 = vst [vmem:[%s2 + $0xa8] sm:$0xff] %v183
  %232 = vst [vmem:[%s2 + $0xb0] sm:$0xff] %v186
  %233 = vst [vmem:[%s2 + $0xb8] sm:$0xff] %v188
  %234 = vst [vmem:[%s2 + $0xc0] sm:$0xff] %v191
  %235 = vst [vmem:[%s2 + $0xc8] sm:$0xff] %v193
  %236 = vst [vmem:[%s2 + $0xd0] sm:$0xff] %v196
  %237 = vst [vmem:[%s2 + $0xd8] sm:$0xff] %v198
  %238 = vst [vmem:[%s2 + $0xe0] sm:$0xff] %v201
  %239 = vst [vmem:[%s2 + $0xe8] sm:$0xff] %v203
  %240 = vst [vmem:[%s2 + $0xf0] sm:$0xff] %v206
  %241 = vst [vmem:[%s2 + $0xf8] sm:$0xff] %v208
  // Predicated region
  $region10: #{dgg_forward.4} parent=0 // pred_check
    _
  $region11: #{dgg_forward.4} parent=0 // pred_check_branch
    %243 = sbr.rel (0) target = $region13
  $region12: #{dgg_forward.4} parent=0 // pred_region
    _
  $region13: #{dgg_forward.4} parent=0 // pred_fallthru
    _
  // Predicated region
  $region14: #{dgg_forward.4} parent=0 // pred_check
    _
  $region15: #{dgg_forward.4} parent=0 // pred_check_branch
    %245 = sbr.rel (0) target = $region17
  $region16: #{dgg_forward.4} parent=0 // pred_region
    _
  $region17: #{dgg_forward.4} parent=0 // pred_fallthru
    _

// kernel: dgg_forward.3
$region0: #{dgg_forward.3}
  #allocation0 [shape = 'u32[]', space=smem, size = 0x4, offset = 0x4, fixed_abs, tag = 'smem constant byte address 0x4 - core index']
  #allocation1 [shape = 'u32[72,128]{1,0:T(1,128)}', space=vmem, size = 0x9000, scoped, tag = 'internal scratch']
  %s0 = inlined_call_operand.vmem [shape: f32[128,36], index: 0, kind: input, shape index: {}]
  %s1 = inlined_call_operand.vmem [shape: f32[36,64], index: 1, kind: input, shape index: {}]
  %s2 = inlined_call_operand.vmem [shape: f32[1,64], index: 2, kind: input, shape index: {}]
  %s3 = inlined_call_operand.vmem [shape: f32[1,64], index: 3, kind: input, shape index: {}]
  %s4 = inlined_call_operand.vmem [shape: f32[1,64], index: 4, kind: input, shape index: {}]
  %s5 = inlined_call_operand.vmem [shape: f32[128,64], index: 5, kind: output, shape index: {}]
  %s6 = sld [smem:[#allocation0]]
  $region30: #{dgg_forward.3} parent=0
    _
  %s8 = ssub.s32 1, %s6
  %s9 = scalar_select 0, %s8, %s6
  // Predicated region
  $region2: #{dgg_forward.3} parent=0 // pred_check
    _
  $region3: #{dgg_forward.3} parent=0 // pred_check_branch
    %11 = sbr.rel (0) target = $region5
  $region4: #{dgg_forward.3} parent=0 // pred_region
    _
  $region5: #{dgg_forward.3} parent=0 // pred_fallthru
    _
  // Predicated region
  $region6: #{dgg_forward.3} parent=0 // pred_check
    _
  $region7: #{dgg_forward.3} parent=0 // pred_check_branch
    %13 = sbr.rel (0) target = $region9
  $region8: #{dgg_forward.3} parent=0 // pred_region
    _
  $region9: #{dgg_forward.3} parent=0 // pred_fallthru
    _
  // Predicated region
  $region10: #{dgg_forward.3} parent=0 // pred_check
    _
  $region11: #{dgg_forward.3} parent=0 // pred_check_branch
    %15 = sbr.rel (0) target = $region13
  $region12: #{dgg_forward.3} parent=0 // pred_region
    _
  $region13: #{dgg_forward.3} parent=0 // pred_fallthru
    _
  // Predicated region
  $region14: #{dgg_forward.3} parent=0 // pred_check
    _
  $region15: #{dgg_forward.3} parent=0 // pred_check_branch
    %17 = sbr.rel (0) target = $region17
  $region16: #{dgg_forward.3} parent=0 // pred_region
    _
  $region17: #{dgg_forward.3} parent=0 // pred_fallthru
    _
  // Predicated region
  $region18: #{dgg_forward.3} parent=0 // pred_check
    _
  $region19: #{dgg_forward.3} parent=0 // pred_check_branch
    %19 = sbr.rel (0) target = $region21
  $region20: #{dgg_forward.3} parent=0 // pred_region
    _
  $region21: #{dgg_forward.3} parent=0 // pred_fallthru
    _
  %v21 = vld [vmem:[%s0] sm:$0xff]
  %v22 = vld [vmem:[%s0 + $0x8] sm:$0xff]
  %v23 = vld [vmem:[%s0 + $0x10] sm:$0xff]
  %v24 = vld [vmem:[%s0 + $0x18] sm:$0xff]
  %v25 = vld [vmem:[%s0 + $0x20] sm:$0xff]
  %v26 = vld [vmem:[%s0 + $0x28] sm:$0xff]
  %v27 = vld [vmem:[%s0 + $0x30] sm:$0xff]
  %v28 = vld [vmem:[%s0 + $0x38] sm:$0xff]
  %v29 = vld [vmem:[%s0 + $0x40] sm:$0xff]
  %v30 = vld [vmem:[%s0 + $0x48] sm:$0xff]
  %v31 = vld [vmem:[%s0 + $0x50] sm:$0xff]
  %v32 = vld [vmem:[%s0 + $0x58] sm:$0xff]
  %v33 = vld [vmem:[%s0 + $0x60] sm:$0xff]
  %v34 = vld [vmem:[%s0 + $0x68] sm:$0xff]
  %v35 = vld [vmem:[%s0 + $0x70] sm:$0xff]
  %v36 = vld [vmem:[%s0 + $0x78] sm:$0xff]
  %v37 = vpack.c.bf16 %v22, %v21
  %v38 = vpack.c.bf16 %v24, %v23
  %v39 = vpack.c.bf16 %v26, %v25
  %v40 = vpack.c.bf16 %v28, %v27
  %v41 = vpack.c.bf16 %v30, %v29
  %v42 = vpack.c.bf16 %v32, %v31
  %v43 = vpack.c.bf16 %v34, %v33
  %v44 = vpack.c.bf16 %v36, %v35
  %v45 = vld [vmem:[%s1] sm:$0xff]
  %v46 = vld [vmem:[%s1 + $0x8] sm:$0xff]
  %v47 = vld [vmem:[%s1 + $0x10] sm:$0xff]
  %v48 = vld [vmem:[%s1 + $0x18] sm:$0xff]
  %v49 = vld [vmem:[%s1 + $0x20] sm:$0xf]
  %v50 = vpack.c.bf16 %v46, %v45
  %v51 = vpack.c.bf16 %v48, %v47
  %v52 = vpack.c.bf16 %v49, %v49
  %v53 = vld [vmem:[%s2] sm:$0x1]
  %v55 = vperm.slane %v53, 0
  %vm57 = vcmask 293888
  %v59 = vsel %vm57, %v37, 0
  %v62 = vsel %vm57, %v38, 0
  %v65 = vsel %vm57, %v39, 0
  %v68 = vsel %vm57, %v40, 0
  %v71 = vsel %vm57, %v41, 0
  %v74 = vsel %vm57, %v42, 0
  %v77 = vsel %vm57, %v43, 0
  %v80 = vsel %vm57, %v44, 0
  %vm82 = vcmask 1041408
  %v84 = vsel %vm82, %v52, 0
  %86 = vmatpush.bf16.msra.mxu0 0
  %87 = vmatpush.bf16.msra.mxu0 0
  %88 = vmatpush.bf16.msra.mxu0 0
  %89 = vmatpush.bf16.msra.mxu0 0
  %90 = vmatpush.bf16.msra.mxu0 0
  %91 = vmatpush.bf16.msra.mxu0 %v84
  %92 = vmatpush.bf16.msra.mxu0 %v51
  %93 = vmatpush.bf16.msra.mxu0 %v50
  %94 = vmatmul.bf16.gmra.mxu0 %v59
  %v95 = vpop.f32.mrf.mxu0
  %v96 = vadd.f32 %v55, %v95
  %v97 = vpop.f32.mrf.mxu0
  %v98 = vadd.f32 %v55, %v97
  %99 = vmatmul.bf16.gmra.mxu0 %v62
  %v100 = vpop.f32.mrf.mxu0
  %v101 = vadd.f32 %v55, %v100
  %v102 = vpop.f32.mrf.mxu0
  %v103 = vadd.f32 %v55, %v102
  %104 = vmatmul.bf16.gmra.mxu0 %v65
  %v105 = vpop.f32.mrf.mxu0
  %v106 = vadd.f32 %v55, %v105
  %v107 = vpop.f32.mrf.mxu0
  %v108 = vadd.f32 %v55, %v107
  %109 = vmatmul.bf16.gmra.mxu0 %v68
  %v110 = vpop.f32.mrf.mxu0
  %v111 = vadd.f32 %v55, %v110
  %v112 = vpop.f32.mrf.mxu0
  %v113 = vadd.f32 %v55, %v112
  %114 = vmatmul.bf16.gmra.mxu0 %v71
  %v115 = vpop.f32.mrf.mxu0
  %v116 = vadd.f32 %v55, %v115
  %v117 = vpop.f32.mrf.mxu0
  %v118 = vadd.f32 %v55, %v117
  %119 = vmatmul.bf16.gmra.mxu0 %v74
  %v120 = vpop.f32.mrf.mxu0
  %v121 = vadd.f32 %v55, %v120
  %v122 = vpop.f32.mrf.mxu0
  %v123 = vadd.f32 %v55, %v122
  %124 = vmatmul.bf16.gmra.mxu0 %v77
  %v125 = vpop.f32.mrf.mxu0
  %v126 = vadd.f32 %v55, %v125
  %v127 = vpop.f32.mrf.mxu0
  %v128 = vadd.f32 %v55, %v127
  %129 = vmatmul.bf16.gmra.mxu0 %v80
  %v130 = vpop.f32.mrf.mxu0
  %v131 = vadd.f32 %v55, %v130
  %v132 = vpop.f32.mrf.mxu0
  %v133 = vadd.f32 %v55, %v132
  %134 = vdwg.mxu0
  %vm135 = vcmp.ge.f32.partialorder %v96, 0.0
  %vm136 = vcmp.ge.f32.partialorder %v98, 0.0
  %vm137 = vcmp.ge.f32.partialorder %v101, 0.0
  %vm138 = vcmp.ge.f32.partialorder %v103, 0.0
  %vm139 = vcmp.ge.f32.partialorder %v106, 0.0
  %vm140 = vcmp.ge.f32.partialorder %v108, 0.0
  %vm141 = vcmp.ge.f32.partialorder %v111, 0.0
  %vm142 = vcmp.ge.f32.partialorder %v113, 0.0
  %vm143 = vcmp.ge.f32.partialorder %v116, 0.0
  %vm144 = vcmp.ge.f32.partialorder %v118, 0.0
  %vm145 = vcmp.ge.f32.partialorder %v121, 0.0
  %vm146 = vcmp.ge.f32.partialorder %v123, 0.0
  %vm147 = vcmp.ge.f32.partialorder %v126, 0.0
  %vm148 = vcmp.ge.f32.partialorder %v128, 0.0
  %vm149 = vcmp.ge.f32.partialorder %v131, 0.0
  %vm150 = vcmp.ge.f32.partialorder %v133, 0.0
  %v151 = vmul.f32 %v96, 0.01
  %v152 = vmul.f32 %v98, 0.01
  %v153 = vmul.f32 %v101, 0.01
  %v154 = vmul.f32 %v103, 0.01
  %v155 = vmul.f32 %v106, 0.01
  %v156 = vmul.f32 %v108, 0.01
  %v157 = vmul.f32 %v111, 0.01
  %v158 = vmul.f32 %v113, 0.01
  %v159 = vmul.f32 %v116, 0.01
  %v160 = vmul.f32 %v118, 0.01
  %v161 = vmul.f32 %v121, 0.01
  %v162 = vmul.f32 %v123, 0.01
  %v163 = vmul.f32 %v126, 0.01
  %v164 = vmul.f32 %v128, 0.01
  %v165 = vmul.f32 %v131, 0.01
  %v166 = vmul.f32 %v133, 0.01
  %v167 = vsel %vm135, %v96, %v151
  %v168 = vsel %vm136, %v98, %v152
  %v169 = vsel %vm137, %v101, %v153
  %v170 = vsel %vm138, %v103, %v154
  %v171 = vsel %vm139, %v106, %v155
  %v172 = vsel %vm140, %v108, %v156
  %v173 = vsel %vm141, %v111, %v157
  %v174 = vsel %vm142, %v113, %v158
  %v175 = vsel %vm143, %v116, %v159
  %v176 = vsel %vm144, %v118, %v160
  %v177 = vsel %vm145, %v121, %v161
  %v178 = vsel %vm146, %v123, %v162
  %v179 = vsel %vm147, %v126, %v163
  %v180 = vsel %vm148, %v128, %v164
  %v181 = vsel %vm149, %v131, %v165
  %v182 = vsel %vm150, %v133, %v166
  %vm183 = vcmask 523264
  %v184 = vsel %vm183, %v167, 0.0
  %v185 = vsel %vm183, %v168, 0.0
  %v186 = vadd.f32 %v184, %v185
  %v187 = vsel %vm183, %v169, 0.0
  %v188 = vadd.f32 %v186, %v187
  %v189 = vsel %vm183, %v170, 0.0
  %v190 = vadd.f32 %v188, %v189
  %v191 = vsel %vm183, %v171, 0.0
  %v192 = vadd.f32 %v190, %v191
  %v193 = vsel %vm183, %v172, 0.0
  %v194 = vadd.f32 %v192, %v193
  %v195 = vsel %vm183, %v173, 0.0
  %v196 = vadd.f32 %v194, %v195
  %v197 = vsel %vm183, %v174, 0.0
  %v198 = vadd.f32 %v196, %v197
  %v199 = vsel %vm183, %v175, 0.0
  %v200 = vadd.f32 %v198, %v199
  %v201 = vsel %vm183, %v176, 0.0
  %v202 = vadd.f32 %v200, %v201
  %v203 = vsel %vm183, %v177, 0.0
  %v204 = vadd.f32 %v202, %v203
  %v205 = vsel %vm183, %v178, 0.0
  %v206 = vadd.f32 %v204, %v205
  %v207 = vsel %vm183, %v179, 0.0
  %v208 = vadd.f32 %v206, %v207
  %v209 = vsel %vm183, %v180, 0.0
  %v210 = vadd.f32 %v208, %v209
  %v211 = vsel %vm183, %v181, 0.0
  %v212 = vadd.f32 %v210, %v211
  %v213 = vsel %vm183, %v182, 0.0
  %v214 = vadd.f32 %v212, %v213
  %v215 = vrot.slane %v214, 4
  %v216 = vadd.f32 %v214, %v215
  %v217 = vrot.slane %v216, 2
  %v218 = vadd.f32 %v216, %v217
  %v219 = vrot.slane %v218, 1
  %v220 = vadd.f32 %v218, %v219
  %v221 = vrcp.pop 128.0
  %v222 = vmul.f32 128.0, %v221
  %v223 = vsub.f32 1.0, %v222
  %v224 = vmul.f32 %v221, %v223
  %v225 = vadd.f32 %v221, %v224
  %vm226 = vweird.f32 %v221
  %v227 = vsel %vm226, %v221, %v225
  %v228 = vmul.f32 %v220, %v227
  %v229 = vmul.f32 %v167, %v167
  %v230 = vmul.f32 %v168, %v168
  %v231 = vmul.f32 %v169, %v169
  %v232 = vmul.f32 %v170, %v170
  %v233 = vmul.f32 %v171, %v171
  %v234 = vmul.f32 %v172, %v172
  %v235 = vmul.f32 %v173, %v173
  %v236 = vmul.f32 %v174, %v174
  %v237 = vmul.f32 %v175, %v175
  %v238 = vmul.f32 %v176, %v176
  %v239 = vmul.f32 %v177, %v177
  %v240 = vmul.f32 %v178, %v178
  %v241 = vmul.f32 %v179, %v179
  %v242 = vmul.f32 %v180, %v180
  %v243 = vmul.f32 %v181, %v181
  %v244 = vmul.f32 %v182, %v182
  %v245 = vsel %vm183, %v229, 0.0
  %v246 = vsel %vm183, %v230, 0.0
  %v247 = vadd.f32 %v245, %v246
  %v248 = vsel %vm183, %v231, 0.0
  %v249 = vadd.f32 %v247, %v248
  %v250 = vsel %vm183, %v232, 0.0
  %v251 = vadd.f32 %v249, %v250
  %v252 = vsel %vm183, %v233, 0.0
  %v253 = vadd.f32 %v251, %v252
  %v254 = vsel %vm183, %v234, 0.0
  %v255 = vadd.f32 %v253, %v254
  %v256 = vsel %vm183, %v235, 0.0
  %v257 = vadd.f32 %v255, %v256
  %v258 = vsel %vm183, %v236, 0.0
  %v259 = vadd.f32 %v257, %v258
  %v260 = vsel %vm183, %v237, 0.0
  %v261 = vadd.f32 %v259, %v260
  %v262 = vsel %vm183, %v238, 0.0
  %v263 = vadd.f32 %v261, %v262
  %v264 = vsel %vm183, %v239, 0.0
  %v265 = vadd.f32 %v263, %v264
  %v266 = vsel %vm183, %v240, 0.0
  %v267 = vadd.f32 %v265, %v266
  %v268 = vsel %vm183, %v241, 0.0
  %v269 = vadd.f32 %v267, %v268
  %v270 = vsel %vm183, %v242, 0.0
  %v271 = vadd.f32 %v269, %v270
  %v272 = vsel %vm183, %v243, 0.0
  %v273 = vadd.f32 %v271, %v272
  %v274 = vsel %vm183, %v244, 0.0
  %v275 = vadd.f32 %v273, %v274
  %v276 = vrot.slane %v275, 4
  %v277 = vadd.f32 %v275, %v276
  %v278 = vrot.slane %v277, 2
  %v279 = vadd.f32 %v277, %v278
  %v280 = vrot.slane %v279, 1
  %v281 = vadd.f32 %v279, %v280
  %v282 = vmul.f32 %v281, %v227
  %v283 = vmul.f32 %v228, %v228
  %v284 = vsub.f32 %v282, %v283
  %v285 = vmax.f32 %v284, 0.0
  %v286 = vsub.f32 %v167, %v228
  %v287 = vsub.f32 %v168, %v228
  %v288 = vsub.f32 %v169, %v228
  %v289 = vsub.f32 %v170, %v228
  %v290 = vsub.f32 %v171, %v228
  %v291 = vsub.f32 %v172, %v228
  %v292 = vsub.f32 %v173, %v228
  %v293 = vsub.f32 %v174, %v228
  %v294 = vsub.f32 %v175, %v228
  %v295 = vsub.f32 %v176, %v228
  %v296 = vsub.f32 %v177, %v228
  %v297 = vsub.f32 %v178, %v228
  %v298 = vsub.f32 %v179, %v228
  %v299 = vsub.f32 %v180, %v228
  %v300 = vsub.f32 %v181, %v228
  %v301 = vsub.f32 %v182, %v228
  %v302 = vadd.f32 %v285, 1e-05
  %v303 = vrsqrt.pop %v302
  %v304 = vmul.f32 %v303, %v302
  %v305 = vmul.f32 %v304, %v303
  %v306 = vmul.f32 0.5, %v305
  %v307 = vsub.f32 1.5, %v306
  %v308 = vmul.f32 %v303, %v307
  %vm309 = vweird.f32 %v302
  %vm310 = vweird.f32 %v303
  %vm311 = vmor %vm309, %vm310
  %v312 = vsel %vm311, %v303, %v308
  %v313 = vmul.f32 %v286, %v312
  %v314 = vmul.f32 %v287, %v312
  %v315 = vmul.f32 %v288, %v312
  %v316 = vmul.f32 %v289, %v312
  %v317 = vmul.f32 %v290, %v312
  %v318 = vmul.f32 %v291, %v312
  %v319 = vmul.f32 %v292, %v312
  %v320 = vmul.f32 %v293, %v312
  %v321 = vmul.f32 %v294, %v312
  %v322 = vmul.f32 %v295, %v312
  %v323 = vmul.f32 %v296, %v312
  %v324 = vmul.f32 %v297, %v312
  %v325 = vmul.f32 %v298, %v312
  %v326 = vmul.f32 %v299, %v312
  %v327 = vmul.f32 %v300, %v312
  %v328 = vmul.f32 %v301, %v312
  %v329 = vld [vmem:[%s3] sm:$0x1]
  %v331 = vperm.slane %v329, 0
  %v333 = vmul.f32 %v313, %v331
  %v334 = vmul.f32 %v314, %v331
  %v335 = vmul.f32 %v315, %v331
  %v336 = vmul.f32 %v316, %v331
  %v337 = vmul.f32 %v317, %v331
  %v338 = vmul.f32 %v318, %v331
  %v339 = vmul.f32 %v319, %v331
  %v340 = vmul.f32 %v320, %v331
  %v341 = vmul.f32 %v321, %v331
  %v342 = vmul.f32 %v322, %v331
  %v343 = vmul.f32 %v323, %v331
  %v344 = vmul.f32 %v324, %v331
  %v345 = vmul.f32 %v325, %v331
  %v346 = vmul.f32 %v326, %v331
  %v347 = vmul.f32 %v327, %v331
  %v348 = vmul.f32 %v328, %v331
  %v349 = vld [vmem:[%s4] sm:$0x1]
  %v351 = vperm.slane %v349, 0
  %v353 = vadd.f32 %v333, %v351
  %v354 = vadd.f32 %v334, %v351
  %v355 = vadd.f32 %v335, %v351
  %v356 = vadd.f32 %v336, %v351
  %v357 = vadd.f32 %v337, %v351
  %v358 = vadd.f32 %v338, %v351
  %v359 = vadd.f32 %v339, %v351
  %v360 = vadd.f32 %v340, %v351
  %v361 = vadd.f32 %v341, %v351
  %v362 = vadd.f32 %v342, %v351
  %v363 = vadd.f32 %v343, %v351
  %v364 = vadd.f32 %v344, %v351
  %v365 = vadd.f32 %v345, %v351
  %v366 = vadd.f32 %v346, %v351
  %v367 = vadd.f32 %v347, %v351
  %v368 = vadd.f32 %v348, %v351
  %369 = vst.msk [vmem:[%s5] sm:$0xff] %vm183, %v353
  %370 = vst.msk [vmem:[%s5 + $0x8] sm:$0xff] %vm183, %v354
  %371 = vst.msk [vmem:[%s5 + $0x10] sm:$0xff] %vm183, %v355
  %372 = vst.msk [vmem:[%s5 + $0x18] sm:$0xff] %vm183, %v356
  %373 = vst.msk [vmem:[%s5 + $0x20] sm:$0xff] %vm183, %v357
  %374 = vst.msk [vmem:[%s5 + $0x28] sm:$0xff] %vm183, %v358
  %375 = vst.msk [vmem:[%s5 + $0x30] sm:$0xff] %vm183, %v359
  %376 = vst.msk [vmem:[%s5 + $0x38] sm:$0xff] %vm183, %v360
  %377 = vst.msk [vmem:[%s5 + $0x40] sm:$0xff] %vm183, %v361
  %378 = vst.msk [vmem:[%s5 + $0x48] sm:$0xff] %vm183, %v362
  %379 = vst.msk [vmem:[%s5 + $0x50] sm:$0xff] %vm183, %v363
  %380 = vst.msk [vmem:[%s5 + $0x58] sm:$0xff] %vm183, %v364
  %381 = vst.msk [vmem:[%s5 + $0x60] sm:$0xff] %vm183, %v365
  %382 = vst.msk [vmem:[%s5 + $0x68] sm:$0xff] %vm183, %v366
  %383 = vst.msk [vmem:[%s5 + $0x70] sm:$0xff] %vm183, %v367
  %384 = vst.msk [vmem:[%s5 + $0x78] sm:$0xff] %vm183, %v368
  // Predicated region
  $region22: #{dgg_forward.3} parent=0 // pred_check
    _
  $region23: #{dgg_forward.3} parent=0 // pred_check_branch
    %386 = sbr.rel (0) target = $region25
  $region24: #{dgg_forward.3} parent=0 // pred_region
    _
  $region25: #{dgg_forward.3} parent=0 // pred_fallthru
    _
  // Predicated region
  $region26: #{dgg_forward.3} parent=0 // pred_check
    _
  $region27: #{dgg_forward.3} parent=0 // pred_check_branch
    %388 = sbr.rel (0) target = $region29
  $region28: #{dgg_forward.3} parent=0 // pred_region
    _
  $region29: #{dgg_forward.3} parent=0 // pred_fallthru
    _

// kernel: dgg_forward.5
$region0: #{dgg_forward.5}
  #allocation0 [shape = 'u32[]', space=smem, size = 0x4, offset = 0x4, fixed_abs, tag = 'smem constant byte address 0x4 - core index']
  #allocation1 [shape = 'u32[72,128]{1,0:T(1,128)}', space=vmem, size = 0x9000, scoped, tag = 'internal scratch']
  %s0 = inlined_call_operand.vmem [shape: f32[2,64,64], index: 0, kind: input, shape index: {}]
  %s1 = inlined_call_operand.vmem [shape: f32[2,256,64], index: 1, kind: input, shape index: {}]
  %s2 = inlined_call_operand.vmem [shape: f32[256,64], index: 2, kind: input, shape index: {}]
  %s3 = inlined_call_operand.vmem [shape: f32[1,64], index: 3, kind: input, shape index: {}]
  %s4 = inlined_call_operand.vmem [shape: f32[1,64], index: 4, kind: input, shape index: {}]
  %s5 = inlined_call_operand.vmem [shape: f32[1,64], index: 5, kind: input, shape index: {}]
  %s6 = inlined_call_operand.vmem [shape: f32[64,10], index: 6, kind: input, shape index: {}]
  %s7 = inlined_call_operand.vmem [shape: f32[1,10], index: 7, kind: input, shape index: {}]
  %s8 = inlined_call_operand.vmem [shape: f32[2,10], index: 8, kind: output, shape index: {}]
  %s9 = sld [smem:[#allocation0]]
  $region42: #{dgg_forward.5} parent=0
    _
  %s11 = ssub.s32 1, %s9
  %s12 = scalar_select 0, %s11, %s9
  // Predicated region
  $region2: #{dgg_forward.5} parent=0 // pred_check
    _
  $region3: #{dgg_forward.5} parent=0 // pred_check_branch
    %14 = sbr.rel (0) target = $region5
  $region4: #{dgg_forward.5} parent=0 // pred_region
    _
  $region5: #{dgg_forward.5} parent=0 // pred_fallthru
    _
  // Predicated region
  $region6: #{dgg_forward.5} parent=0 // pred_check
    _
  $region7: #{dgg_forward.5} parent=0 // pred_check_branch
    %16 = sbr.rel (0) target = $region9
  $region8: #{dgg_forward.5} parent=0 // pred_region
    _
  $region9: #{dgg_forward.5} parent=0 // pred_fallthru
    _
  // Predicated region
  $region10: #{dgg_forward.5} parent=0 // pred_check
    _
  $region11: #{dgg_forward.5} parent=0 // pred_check_branch
    %18 = sbr.rel (0) target = $region13
  $region12: #{dgg_forward.5} parent=0 // pred_region
    _
  $region13: #{dgg_forward.5} parent=0 // pred_fallthru
    _
  // Predicated region
  $region14: #{dgg_forward.5} parent=0 // pred_check
    _
  $region15: #{dgg_forward.5} parent=0 // pred_check_branch
    %20 = sbr.rel (0) target = $region17
  $region16: #{dgg_forward.5} parent=0 // pred_region
    _
  $region17: #{dgg_forward.5} parent=0 // pred_fallthru
    _
  // Predicated region
  $region18: #{dgg_forward.5} parent=0 // pred_check
    _
  $region19: #{dgg_forward.5} parent=0 // pred_check_branch
    %22 = sbr.rel (0) target = $region21
  $region20: #{dgg_forward.5} parent=0 // pred_region
    _
  $region21: #{dgg_forward.5} parent=0 // pred_fallthru
    _
  // Predicated region
  $region22: #{dgg_forward.5} parent=0 // pred_check
    _
  $region23: #{dgg_forward.5} parent=0 // pred_check_branch
    %24 = sbr.rel (0) target = $region25
  $region24: #{dgg_forward.5} parent=0 // pred_region
    _
  $region25: #{dgg_forward.5} parent=0 // pred_fallthru
    _
  // Predicated region
  $region26: #{dgg_forward.5} parent=0 // pred_check
    _
  $region27: #{dgg_forward.5} parent=0 // pred_check_branch
    %26 = sbr.rel (0) target = $region29
  $region28: #{dgg_forward.5} parent=0 // pred_region
    _
  $region29: #{dgg_forward.5} parent=0 // pred_fallthru
    _
  // Predicated region
  $region30: #{dgg_forward.5} parent=0 // pred_check
    _
  $region31: #{dgg_forward.5} parent=0 // pred_check_branch
    %28 = sbr.rel (0) target = $region33
  $region32: #{dgg_forward.5} parent=0 // pred_region
    _
  $region33: #{dgg_forward.5} parent=0 // pred_fallthru
    _
  %v29 = vld [vmem:[%s0] sm:$0xff]
  %v30 = vld [vmem:[%s0 + $0x8] sm:$0xff]
  %v31 = vld [vmem:[%s0 + $0x10] sm:$0xff]
  %v32 = vld [vmem:[%s0 + $0x18] sm:$0xff]
  %v33 = vld [vmem:[%s0 + $0x20] sm:$0xff]
  %v34 = vld [vmem:[%s0 + $0x28] sm:$0xff]
  %v35 = vld [vmem:[%s0 + $0x30] sm:$0xff]
  %v36 = vld [vmem:[%s0 + $0x38] sm:$0xff]
  %v37 = vld [vmem:[%s0 + $0x40] sm:$0xff]
  %v38 = vld [vmem:[%s0 + $0x48] sm:$0xff]
  %v39 = vld [vmem:[%s0 + $0x50] sm:$0xff]
  %v40 = vld [vmem:[%s0 + $0x58] sm:$0xff]
  %v41 = vld [vmem:[%s0 + $0x60] sm:$0xff]
  %v42 = vld [vmem:[%s0 + $0x68] sm:$0xff]
  %v43 = vld [vmem:[%s0 + $0x70] sm:$0xff]
  %v44 = vld [vmem:[%s0 + $0x78] sm:$0xff]
  %v45 = vld [vmem:[%s1] sm:$0xff]
  %v46 = vld [vmem:[%s1 + $0x8] sm:$0xff]
  %v47 = vld [vmem:[%s1 + $0x10] sm:$0xff]
  %v48 = vld [vmem:[%s1 + $0x18] sm:$0xff]
  %v49 = vld [vmem:[%s1 + $0x20] sm:$0xff]
  %v50 = vld [vmem:[%s1 + $0x28] sm:$0xff]
  %v51 = vld [vmem:[%s1 + $0x30] sm:$0xff]
  %v52 = vld [vmem:[%s1 + $0x38] sm:$0xff]
  %v53 = vld [vmem:[%s1 + $0x40] sm:$0xff]
  %v54 = vld [vmem:[%s1 + $0x48] sm:$0xff]
  %v55 = vld [vmem:[%s1 + $0x50] sm:$0xff]
  %v56 = vld [vmem:[%s1 + $0x58] sm:$0xff]
  %v57 = vld [vmem:[%s1 + $0x60] sm:$0xff]
  %v58 = vld [vmem:[%s1 + $0x68] sm:$0xff]
  %v59 = vld [vmem:[%s1 + $0x70] sm:$0xff]
  %v60 = vld [vmem:[%s1 + $0x78] sm:$0xff]
  %v61 = vld [vmem:[%s1 + $0x80] sm:$0xff]
  %v62 = vld [vmem:[%s1 + $0x88] sm:$0xff]
  %v63 = vld [vmem:[%s1 + $0x90] sm:$0xff]
  %v64 = vld [vmem:[%s1 + $0x98] sm:$0xff]
  %v65 = vld [vmem:[%s1 + $0xa0] sm:$0xff]
  %v66 = vld [vmem:[%s1 + $0xa8] sm:$0xff]
  %v67 = vld [vmem:[%s1 + $0xb0] sm:$0xff]
  %v68 = vld [vmem:[%s1 + $0xb8] sm:$0xff]
  %v69 = vld [vmem:[%s1 + $0xc0] sm:$0xff]
  %v70 = vld [vmem:[%s1 + $0xc8] sm:$0xff]
  %v71 = vld [vmem:[%s1 + $0xd0] sm:$0xff]
  %v72 = vld [vmem:[%s1 + $0xd8] sm:$0xff]
  %v73 = vld [vmem:[%s1 + $0xe0] sm:$0xff]
  %v74 = vld [vmem:[%s1 + $0xe8] sm:$0xff]
  %v75 = vld [vmem:[%s1 + $0xf0] sm:$0xff]
  %v76 = vld [vmem:[%s1 + $0xf8] sm:$0xff]
  %v77 = vld [vmem:[%s1 + $0x100] sm:$0xff]
  %v78 = vld [vmem:[%s1 + $0x108] sm:$0xff]
  %v79 = vld [vmem:[%s1 + $0x110] sm:$0xff]
  %v80 = vld [vmem:[%s1 + $0x118] sm:$0xff]
  %v81 = vld [vmem:[%s1 + $0x120] sm:$0xff]
  %v82 = vld [vmem:[%s1 + $0x128] sm:$0xff]
  %v83 = vld [vmem:[%s1 + $0x130] sm:$0xff]
  %v84 = vld [vmem:[%s1 + $0x138] sm:$0xff]
  %v85 = vld [vmem:[%s1 + $0x140] sm:$0xff]
  %v86 = vld [vmem:[%s1 + $0x148] sm:$0xff]
  %v87 = vld [vmem:[%s1 + $0x150] sm:$0xff]
  %v88 = vld [vmem:[%s1 + $0x158] sm:$0xff]
  %v89 = vld [vmem:[%s1 + $0x160] sm:$0xff]
  %v90 = vld [vmem:[%s1 + $0x168] sm:$0xff]
  %v91 = vld [vmem:[%s1 + $0x170] sm:$0xff]
  %v92 = vld [vmem:[%s1 + $0x178] sm:$0xff]
  %v93 = vld [vmem:[%s1 + $0x180] sm:$0xff]
  %v94 = vld [vmem:[%s1 + $0x188] sm:$0xff]
  %v95 = vld [vmem:[%s1 + $0x190] sm:$0xff]
  %v96 = vld [vmem:[%s1 + $0x198] sm:$0xff]
  %v97 = vld [vmem:[%s1 + $0x1a0] sm:$0xff]
  %v98 = vld [vmem:[%s1 + $0x1a8] sm:$0xff]
  %v99 = vld [vmem:[%s1 + $0x1b0] sm:$0xff]
  %v100 = vld [vmem:[%s1 + $0x1b8] sm:$0xff]
  %v101 = vld [vmem:[%s1 + $0x1c0] sm:$0xff]
  %v102 = vld [vmem:[%s1 + $0x1c8] sm:$0xff]
  %v103 = vld [vmem:[%s1 + $0x1d0] sm:$0xff]
  %v104 = vld [vmem:[%s1 + $0x1d8] sm:$0xff]
  %v105 = vld [vmem:[%s1 + $0x1e0] sm:$0xff]
  %v106 = vld [vmem:[%s1 + $0x1e8] sm:$0xff]
  %v107 = vld [vmem:[%s1 + $0x1f0] sm:$0xff]
  %v108 = vld [vmem:[%s1 + $0x1f8] sm:$0xff]
  %vm109 = vcmask 523264
  %v110 = vsel %vm109, %v29, 0.0
  %v111 = vsel %vm109, %v30, 0.0
  %v112 = vadd.f32 %v110, %v111
  %v113 = vsel %vm109, %v31, 0.0
  %v114 = vadd.f32 %v112, %v113
  %v115 = vsel %vm109, %v32, 0.0
  %v116 = vadd.f32 %v114, %v115
  %v117 = vsel %vm109, %v33, 0.0
  %v118 = vadd.f32 %v116, %v117
  %v119 = vsel %vm109, %v34, 0.0
  %v120 = vadd.f32 %v118, %v119
  %v121 = vsel %vm109, %v35, 0.0
  %v122 = vadd.f32 %v120, %v121
  %v123 = vsel %vm109, %v36, 0.0
  %v124 = vadd.f32 %v122, %v123
  %v125 = vrot.slane %v124, 4
  %v126 = vadd.f32 %v124, %v125
  %v127 = vrot.slane %v126, 2
  %v128 = vadd.f32 %v126, %v127
  %v129 = vrot.slane %v128, 1
  %v130 = vadd.f32 %v128, %v129
  %v131 = vsel %vm109, %v37, 0.0
  %v132 = vsel %vm109, %v38, 0.0
  %v133 = vadd.f32 %v131, %v132
  %v134 = vsel %vm109, %v39, 0.0
  %v135 = vadd.f32 %v133, %v134
  %v136 = vsel %vm109, %v40, 0.0
  %v137 = vadd.f32 %v135, %v136
  %v138 = vsel %vm109, %v41, 0.0
  %v139 = vadd.f32 %v137, %v138
  %v140 = vsel %vm109, %v42, 0.0
  %v141 = vadd.f32 %v139, %v140
  %v142 = vsel %vm109, %v43, 0.0
  %v143 = vadd.f32 %v141, %v142
  %v144 = vsel %vm109, %v44, 0.0
  %v145 = vadd.f32 %v143, %v144
  %v146 = vrot.slane %v145, 4
  %v147 = vadd.f32 %v145, %v146
  %v148 = vrot.slane %v147, 2
  %v149 = vadd.f32 %v147, %v148
  %v150 = vrot.slane %v149, 1
  %v151 = vadd.f32 %v149, %v150
  %v152 = vrcp.pop 64.0
  %v153 = vmul.f32 64.0, %v152
  %v154 = vsub.f32 1.0, %v153
  %v155 = vmul.f32 %v152, %v154
  %v156 = vadd.f32 %v152, %v155
  %vm157 = vweird.f32 %v152
  %v158 = vsel %vm157, %v152, %v156
  %v159 = vmul.f32 %v130, %v158
  %v160 = vmul.f32 %v151, %v158
  %v161 = vsel %vm109, %v29, -inf
  %v162 = vsel %vm109, %v30, -inf
  %v163 = vsel %vm109, %v31, -inf
  %v164 = vmax.f32 %v161, %v163
  %v165 = vsel %vm109, %v32, -inf
  %v166 = vmax.f32 %v162, %v165
  %v167 = vsel %vm109, %v33, -inf
  %v168 = vmax.f32 %v164, %v167
  %v169 = vsel %vm109, %v34, -inf
  %v170 = vmax.f32 %v166, %v169
  %v171 = vsel %vm109, %v35, -inf
  %v172 = vmax.f32 %v168, %v171
  %v173 = vsel %vm109, %v36, -inf
  %v174 = vmax.f32 %v170, %v173
  %v175 = vmax.f32 %v172, %v174
  %v176 = vrot.slane %v175, 4
  %v177 = vmax.f32 %v175, %v176
  %v178 = vrot.slane %v177, 2
  %v179 = vmax.f32 %v177, %v178
  %v180 = vrot.slane %v179, 1
  %v181 = vmax.f32 %v179, %v180
  %v182 = vsel %vm109, %v37, -inf
  %v183 = vsel %vm109, %v38, -inf
  %v184 = vsel %vm109, %v39, -inf
  %v185 = vmax.f32 %v182, %v184
  %v186 = vsel %vm109, %v40, -inf
  %v187 = vmax.f32 %v183, %v186
  %v188 = vsel %vm109, %v41, -inf
  %v189 = vmax.f32 %v185, %v188
  %v190 = vsel %vm109, %v42, -inf
  %v191 = vmax.f32 %v187, %v190
  %v192 = vsel %vm109, %v43, -inf
  %v193 = vmax.f32 %v189, %v192
  %v194 = vsel %vm109, %v44, -inf
  %v195 = vmax.f32 %v191, %v194
  %v196 = vmax.f32 %v193, %v195
  %v197 = vrot.slane %v196, 4
  %v198 = vmax.f32 %v196, %v197
  %v199 = vrot.slane %v198, 2
  %v200 = vmax.f32 %v198, %v199
  %v201 = vrot.slane %v200, 1
  %v202 = vmax.f32 %v200, %v201
  %v203 = vsel %vm109, %v45, 0.0
  %v204 = vsel %vm109, %v46, 0.0
  %v205 = vadd.f32 %v203, %v204
  %v206 = vsel %vm109, %v47, 0.0
  %v207 = vadd.f32 %v205, %v206
  %v208 = vsel %vm109, %v48, 0.0
  %v209 = vadd.f32 %v207, %v208
  %v210 = vsel %vm109, %v49, 0.0
  %v211 = vadd.f32 %v209, %v210
  %v212 = vsel %vm109, %v50, 0.0
  %v213 = vadd.f32 %v211, %v212
  %v214 = vsel %vm109, %v51, 0.0
  %v215 = vadd.f32 %v213, %v214
  %v216 = vsel %vm109, %v52, 0.0
  %v217 = vadd.f32 %v215, %v216
  %v218 = vsel %vm109, %v53, 0.0
  %v219 = vadd.f32 %v217, %v218
  %v220 = vsel %vm109, %v54, 0.0
  %v221 = vadd.f32 %v219, %v220
  %v222 = vsel %vm109, %v55, 0.0
  %v223 = vadd.f32 %v221, %v222
  %v224 = vsel %vm109, %v56, 0.0
  %v225 = vadd.f32 %v223, %v224
  %v226 = vsel %vm109, %v57, 0.0
  %v227 = vadd.f32 %v225, %v226
  %v228 = vsel %vm109, %v58, 0.0
  %v229 = vadd.f32 %v227, %v228
  %v230 = vsel %vm109, %v59, 0.0
  %v231 = vadd.f32 %v229, %v230
  %v232 = vsel %vm109, %v60, 0.0
  %v233 = vadd.f32 %v231, %v232
  %v234 = vsel %vm109, %v61, 0.0
  %v235 = vadd.f32 %v233, %v234
  %v236 = vsel %vm109, %v62, 0.0
  %v237 = vadd.f32 %v235, %v236
  %v238 = vsel %vm109, %v63, 0.0
  %v239 = vadd.f32 %v237, %v238
  %v240 = vsel %vm109, %v64, 0.0
  %v241 = vadd.f32 %v239, %v240
  %v242 = vsel %vm109, %v65, 0.0
  %v243 = vadd.f32 %v241, %v242
  %v244 = vsel %vm109, %v66, 0.0
  %v245 = vadd.f32 %v243, %v244
  %v246 = vsel %vm109, %v67, 0.0
  %v247 = vadd.f32 %v245, %v246
  %v248 = vsel %vm109, %v68, 0.0
  %v249 = vadd.f32 %v247, %v248
  %v250 = vsel %vm109, %v69, 0.0
  %v251 = vadd.f32 %v249, %v250
  %v252 = vsel %vm109, %v70, 0.0
  %v253 = vadd.f32 %v251, %v252
  %v254 = vsel %vm109, %v71, 0.0
  %v255 = vadd.f32 %v253, %v254
  %v256 = vsel %vm109, %v72, 0.0
  %v257 = vadd.f32 %v255, %v256
  %v258 = vsel %vm109, %v73, 0.0
  %v259 = vadd.f32 %v257, %v258
  %v260 = vsel %vm109, %v74, 0.0
  %v261 = vadd.f32 %v259, %v260
  %v262 = vsel %vm109, %v75, 0.0
  %v263 = vadd.f32 %v261, %v262
  %v264 = vsel %vm109, %v76, 0.0
  %v265 = vadd.f32 %v263, %v264
  %v266 = vrot.slane %v265, 4
  %v267 = vadd.f32 %v265, %v266
  %v268 = vrot.slane %v267, 2
  %v269 = vadd.f32 %v267, %v268
  %v270 = vrot.slane %v269, 1
  %v271 = vadd.f32 %v269, %v270
  %v272 = vsel %vm109, %v77, 0.0
  %v273 = vsel %vm109, %v78, 0.0
  %v274 = vadd.f32 %v272, %v273
  %v275 = vsel %vm109, %v79, 0.0
  %v276 = vadd.f32 %v274, %v275
  %v277 = vsel %vm109, %v80, 0.0
  %v278 = vadd.f32 %v276, %v277
  %v279 = vsel %vm109, %v81, 0.0
  %v280 = vadd.f32 %v278, %v279
  %v281 = vsel %vm109, %v82, 0.0
  %v282 = vadd.f32 %v280, %v281
  %v283 = vsel %vm109, %v83, 0.0
  %v284 = vadd.f32 %v282, %v283
  %v285 = vsel %vm109, %v84, 0.0
  %v286 = vadd.f32 %v284, %v285
  %v287 = vsel %vm109, %v85, 0.0
  %v288 = vadd.f32 %v286, %v287
  %v289 = vsel %vm109, %v86, 0.0
  %v290 = vadd.f32 %v288, %v289
  %v291 = vsel %vm109, %v87, 0.0
  %v292 = vadd.f32 %v290, %v291
  %v293 = vsel %vm109, %v88, 0.0
  %v294 = vadd.f32 %v292, %v293
  %v295 = vsel %vm109, %v89, 0.0
  %v296 = vadd.f32 %v294, %v295
  %v297 = vsel %vm109, %v90, 0.0
  %v298 = vadd.f32 %v296, %v297
  %v299 = vsel %vm109, %v91, 0.0
  %v300 = vadd.f32 %v298, %v299
  %v301 = vsel %vm109, %v92, 0.0
  %v302 = vadd.f32 %v300, %v301
  %v303 = vsel %vm109, %v93, 0.0
  %v304 = vadd.f32 %v302, %v303
  %v305 = vsel %vm109, %v94, 0.0
  %v306 = vadd.f32 %v304, %v305
  %v307 = vsel %vm109, %v95, 0.0
  %v308 = vadd.f32 %v306, %v307
  %v309 = vsel %vm109, %v96, 0.0
  %v310 = vadd.f32 %v308, %v309
  %v311 = vsel %vm109, %v97, 0.0
  %v312 = vadd.f32 %v310, %v311
  %v313 = vsel %vm109, %v98, 0.0
  %v314 = vadd.f32 %v312, %v313
  %v315 = vsel %vm109, %v99, 0.0
  %v316 = vadd.f32 %v314, %v315
  %v317 = vsel %vm109, %v100, 0.0
  %v318 = vadd.f32 %v316, %v317
  %v319 = vsel %vm109, %v101, 0.0
  %v320 = vadd.f32 %v318, %v319
  %v321 = vsel %vm109, %v102, 0.0
  %v322 = vadd.f32 %v320, %v321
  %v323 = vsel %vm109, %v103, 0.0
  %v324 = vadd.f32 %v322, %v323
  %v325 = vsel %vm109, %v104, 0.0
  %v326 = vadd.f32 %v324, %v325
  %v327 = vsel %vm109, %v105, 0.0
  %v328 = vadd.f32 %v326, %v327
  %v329 = vsel %vm109, %v106, 0.0
  %v330 = vadd.f32 %v328, %v329
  %v331 = vsel %vm109, %v107, 0.0
  %v332 = vadd.f32 %v330, %v331
  %v333 = vsel %vm109, %v108, 0.0
  %v334 = vadd.f32 %v332, %v333
  %v335 = vrot.slane %v334, 4
  %v336 = vadd.f32 %v334, %v335
  %v337 = vrot.slane %v336, 2
  %v338 = vadd.f32 %v336, %v337
  %v339 = vrot.slane %v338, 1
  %v340 = vadd.f32 %v338, %v339
  %v341 = vrcp.pop 256.0
  %v342 = vmul.f32 256.0, %v341
  %v343 = vsub.f32 1.0, %v342
  %v344 = vmul.f32 %v341, %v343
  %v345 = vadd.f32 %v341, %v344
  %vm346 = vweird.f32 %v341
  %v347 = vsel %vm346, %v341, %v345
  %v348 = vmul.f32 %v271, %v347
  %v349 = vmul.f32 %v340, %v347
  %v350 = vsel %vm109, %v45, -inf
  %v351 = vsel %vm109, %v46, -inf
  %v352 = vsel %vm109, %v47, -inf
  %v353 = vmax.f32 %v350, %v352
  %v354 = vsel %vm109, %v48, -inf
  %v355 = vmax.f32 %v351, %v354
  %v356 = vsel %vm109, %v49, -inf
  %v357 = vmax.f32 %v353, %v356
  %v358 = vsel %vm109, %v50, -inf
  %v359 = vmax.f32 %v355, %v358
  %v360 = vsel %vm109, %v51, -inf
  %v361 = vmax.f32 %v357, %v360
  %v362 = vsel %vm109, %v52, -inf
  %v363 = vmax.f32 %v359, %v362
  %v364 = vsel %vm109, %v53, -inf
  %v365 = vmax.f32 %v361, %v364
  %v366 = vsel %vm109, %v54, -inf
  %v367 = vmax.f32 %v363, %v366
  %v368 = vsel %vm109, %v55, -inf
  %v369 = vmax.f32 %v365, %v368
  %v370 = vsel %vm109, %v56, -inf
  %v371 = vmax.f32 %v367, %v370
  %v372 = vsel %vm109, %v57, -inf
  %v373 = vmax.f32 %v369, %v372
  %v374 = vsel %vm109, %v58, -inf
  %v375 = vmax.f32 %v371, %v374
  %v376 = vsel %vm109, %v59, -inf
  %v377 = vmax.f32 %v373, %v376
  %v378 = vsel %vm109, %v60, -inf
  %v379 = vmax.f32 %v375, %v378
  %v380 = vsel %vm109, %v61, -inf
  %v381 = vmax.f32 %v377, %v380
  %v382 = vsel %vm109, %v62, -inf
  %v383 = vmax.f32 %v379, %v382
  %v384 = vsel %vm109, %v63, -inf
  %v385 = vmax.f32 %v381, %v384
  %v386 = vsel %vm109, %v64, -inf
  %v387 = vmax.f32 %v383, %v386
  %v388 = vsel %vm109, %v65, -inf
  %v389 = vmax.f32 %v385, %v388
  %v390 = vsel %vm109, %v66, -inf
  %v391 = vmax.f32 %v387, %v390
  %v392 = vsel %vm109, %v67, -inf
  %v393 = vmax.f32 %v389, %v392
  %v394 = vsel %vm109, %v68, -inf
  %v395 = vmax.f32 %v391, %v394
  %v396 = vsel %vm109, %v69, -inf
  %v397 = vmax.f32 %v393, %v396
  %v398 = vsel %vm109, %v70, -inf
  %v399 = vmax.f32 %v395, %v398
  %v400 = vsel %vm109, %v71, -inf
  %v401 = vmax.f32 %v397, %v400
  %v402 = vsel %vm109, %v72, -inf
  %v403 = vmax.f32 %v399, %v402
  %v404 = vsel %vm109, %v73, -inf
  %v405 = vmax.f32 %v401, %v404
  %v406 = vsel %vm109, %v74, -inf
  %v407 = vmax.f32 %v403, %v406
  %v408 = vsel %vm109, %v75, -inf
  %v409 = vmax.f32 %v405, %v408
  %v410 = vsel %vm109, %v76, -inf
  %v411 = vmax.f32 %v407, %v410
  %v412 = vmax.f32 %v409, %v411
  %v413 = vrot.slane %v412, 4
  %v414 = vmax.f32 %v412, %v413
  %v415 = vrot.slane %v414, 2
  %v416 = vmax.f32 %v414, %v415
  %v417 = vrot.slane %v416, 1
  %v418 = vmax.f32 %v416, %v417
  %v419 = vsel %vm109, %v77, -inf
  %v420 = vsel %vm109, %v78, -inf
  %v421 = vsel %vm109, %v79, -inf
  %v422 = vmax.f32 %v419, %v421
  %v423 = vsel %vm109, %v80, -inf
  %v424 = vmax.f32 %v420, %v423
  %v425 = vsel %vm109, %v81, -inf
  %v426 = vmax.f32 %v422, %v425
  %v427 = vsel %vm109, %v82, -inf
  %v428 = vmax.f32 %v424, %v427
  %v429 = vsel %vm109, %v83, -inf
  %v430 = vmax.f32 %v426, %v429
  %v431 = vsel %vm109, %v84, -inf
  %v432 = vmax.f32 %v428, %v431
  %v433 = vsel %vm109, %v85, -inf
  %v434 = vmax.f32 %v430, %v433
  %v435 = vsel %vm109, %v86, -inf
  %v436 = vmax.f32 %v432, %v435
  %v437 = vsel %vm109, %v87, -inf
  %v438 = vmax.f32 %v434, %v437
  %v439 = vsel %vm109, %v88, -inf
  %v440 = vmax.f32 %v436, %v439
  %v441 = vsel %vm109, %v89, -inf
  %v442 = vmax.f32 %v438, %v441
  %v443 = vsel %vm109, %v90, -inf
  %v444 = vmax.f32 %v440, %v443
  %v445 = vsel %vm109, %v91, -inf
  %v446 = vmax.f32 %v442, %v445
  %v447 = vsel %vm109, %v92, -inf
  %v448 = vmax.f32 %v444, %v447
  %v449 = vsel %vm109, %v93, -inf
  %v450 = vmax.f32 %v446, %v449
  %v451 = vsel %vm109, %v94, -inf
  %v452 = vmax.f32 %v448, %v451
  %v453 = vsel %vm109, %v95, -inf
  %v454 = vmax.f32 %v450, %v453
  %v455 = vsel %vm109, %v96, -inf
  %v456 = vmax.f32 %v452, %v455
  %v457 = vsel %vm109, %v97, -inf
  %v458 = vmax.f32 %v454, %v457
  %v459 = vsel %vm109, %v98, -inf
  %v460 = vmax.f32 %v456, %v459
  %v461 = vsel %vm109, %v99, -inf
  %v462 = vmax.f32 %v458, %v461
  %v463 = vsel %vm109, %v100, -inf
  %v464 = vmax.f32 %v460, %v463
  %v465 = vsel %vm109, %v101, -inf
  %v466 = vmax.f32 %v462, %v465
  %v467 = vsel %vm109, %v102, -inf
  %v468 = vmax.f32 %v464, %v467
  %v469 = vsel %vm109, %v103, -inf
  %v470 = vmax.f32 %v466, %v469
  %v471 = vsel %vm109, %v104, -inf
  %v472 = vmax.f32 %v468, %v471
  %v473 = vsel %vm109, %v105, -inf
  %v474 = vmax.f32 %v470, %v473
  %v475 = vsel %vm109, %v106, -inf
  %v476 = vmax.f32 %v472, %v475
  %v477 = vsel %vm109, %v107, -inf
  %v478 = vmax.f32 %v474, %v477
  %v479 = vsel %vm109, %v108, -inf
  %v480 = vmax.f32 %v476, %v479
  %v481 = vmax.f32 %v478, %v480
  %v482 = vrot.slane %v481, 4
  %v483 = vmax.f32 %v481, %v482
  %v484 = vrot.slane %v483, 2
  %v485 = vmax.f32 %v483, %v484
  %v486 = vrot.slane %v485, 1
  %v487 = vmax.f32 %v485, %v486
  %v488 = vld [vmem:[%s2] sm:$0xff]
  %v489 = vld [vmem:[%s2 + $0x8] sm:$0xff]
  %v490 = vld [vmem:[%s2 + $0x10] sm:$0xff]
  %v491 = vld [vmem:[%s2 + $0x18] sm:$0xff]
  %v492 = vld [vmem:[%s2 + $0x20] sm:$0xff]
  %v493 = vld [vmem:[%s2 + $0x28] sm:$0xff]
  %v494 = vld [vmem:[%s2 + $0x30] sm:$0xff]
  %v495 = vld [vmem:[%s2 + $0x38] sm:$0xff]
  %v496 = vld [vmem:[%s2 + $0x40] sm:$0xff]
  %v497 = vld [vmem:[%s2 + $0x48] sm:$0xff]
  %v498 = vld [vmem:[%s2 + $0x50] sm:$0xff]
  %v499 = vld [vmem:[%s2 + $0x58] sm:$0xff]
  %v500 = vld [vmem:[%s2 + $0x60] sm:$0xff]
  %v501 = vld [vmem:[%s2 + $0x68] sm:$0xff]
  %v502 = vld [vmem:[%s2 + $0x70] sm:$0xff]
  %v503 = vld [vmem:[%s2 + $0x78] sm:$0xff]
  %v504 = vld [vmem:[%s2 + $0x80] sm:$0xff]
  %v505 = vld [vmem:[%s2 + $0x88] sm:$0xff]
  %v506 = vld [vmem:[%s2 + $0x90] sm:$0xff]
  %v507 = vld [vmem:[%s2 + $0x98] sm:$0xff]
  %v508 = vld [vmem:[%s2 + $0xa0] sm:$0xff]
  %v509 = vld [vmem:[%s2 + $0xa8] sm:$0xff]
  %v510 = vld [vmem:[%s2 + $0xb0] sm:$0xff]
  %v511 = vld [vmem:[%s2 + $0xb8] sm:$0xff]
  %v512 = vld [vmem:[%s2 + $0xc0] sm:$0xff]
  %v513 = vld [vmem:[%s2 + $0xc8] sm:$0xff]
  %v514 = vld [vmem:[%s2 + $0xd0] sm:$0xff]
  %v515 = vld [vmem:[%s2 + $0xd8] sm:$0xff]
  %v516 = vld [vmem:[%s2 + $0xe0] sm:$0xff]
  %v517 = vld [vmem:[%s2 + $0xe8] sm:$0xff]
  %v518 = vld [vmem:[%s2 + $0xf0] sm:$0xff]
  %v519 = vld [vmem:[%s2 + $0xf8] sm:$0xff]
  %vm522 = vcmask 1041409
  %v523 = vsel %vm522, %v487, %v418
  %v524 = vsel %vm109, %v523, 0
  %526 = vmatpush.msra.mxu0 0.0
  %527 = vmatpush.msra.mxu0 0.0
  %528 = vmatpush.msra.mxu0 0.0
  %529 = vmatpush.msra.mxu0 0.0
  %530 = vmatpush.msra.mxu0 0.0
  %531 = vmatpush.msra.mxu0 0.0
  %532 = vmatpush.msra.mxu0 0.0
  %533 = vmatpush.msra.mxu0 0.0
  %534 = vmatpush.msra.mxu0 %v503
  %535 = vmatpush.msra.mxu0 %v502
  %536 = vmatpush.msra.mxu0 %v501
  %537 = vmatpush.msra.mxu0 %v500
  %538 = vmatpush.msra.mxu0 %v499
  %539 = vmatpush.msra.mxu0 %v498
  %540 = vmatpush.msra.mxu0 %v497
  %541 = vmatpush.msra.mxu0 %v496
  %542 = vmatmul.f32.gmra.mxu0 %v524
  %v543 = vpop.f32.mrf.mxu0
  %v544 = vadd.f32 0.0, %v543
  %545 = vdwg.mxu0
  %v548 = vsel %vm522, %v349, %v348
  %v549 = vsel %vm109, %v548, 0
  %551 = vmatpush.msra.mxu0 0.0
  %552 = vmatpush.msra.mxu0 0.0
  %553 = vmatpush.msra.mxu0 0.0
  %554 = vmatpush.msra.mxu0 0.0
  %555 = vmatpush.msra.mxu0 0.0
  %556 = vmatpush.msra.mxu0 0.0
  %557 = vmatpush.msra.mxu0 0.0
  %558 = vmatpush.msra.mxu0 0.0
  %559 = vmatpush.msra.mxu0 %v495
  %560 = vmatpush.msra.mxu0 %v494
  %561 = vmatpush.msra.mxu0 %v493
  %562 = vmatpush.msra.mxu0 %v492
  %563 = vmatpush.msra.mxu0 %v491
  %564 = vmatpush.msra.mxu0 %v490
  %565 = vmatpush.msra.mxu0 %v489
  %566 = vmatpush.msra.mxu0 %v488
  %567 = vmatmul.f32.gmra.mxu0 %v549
  %v568 = vpop.f32.mrf.mxu0
  %v569 = vadd.f32 %v544, %v568
  %570 = vdwg.mxu0
  %v573 = vsel %vm522, %v160, %v159
  %v574 = vsel %vm109, %v573, 0
  %576 = vmatpush.msra.mxu0 0.0
  %577 = vmatpush.msra.mxu0 0.0
  %578 = vmatpush.msra.mxu0 0.0
  %579 = vmatpush.msra.mxu0 0.0
  %580 = vmatpush.msra.mxu0 0.0
  %581 = vmatpush.msra.mxu0 0.0
  %582 = vmatpush.msra.mxu0 0.0
  %583 = vmatpush.msra.mxu0 0.0
  %584 = vmatpush.msra.mxu0 %v511
  %585 = vmatpush.msra.mxu0 %v510
  %586 = vmatpush.msra.mxu0 %v509
  %587 = vmatpush.msra.mxu0 %v508
  %588 = vmatpush.msra.mxu0 %v507
  %589 = vmatpush.msra.mxu0 %v506
  %590 = vmatpush.msra.mxu0 %v505
  %591 = vmatpush.msra.mxu0 %v504
  %592 = vmatmul.f32.gmra.mxu0 %v574
  %v593 = vpop.f32.mrf.mxu0
  %v594 = vadd.f32 0.0, %v593
  %595 = vdwg.mxu0
  %v596 = vadd.f32 %v569, %v594
  %v599 = vsel %vm522, %v202, %v181
  %v600 = vsel %vm109, %v599, 0
  %602 = vmatpush.msra.mxu0 0.0
  %603 = vmatpush.msra.mxu0 0.0
  %604 = vmatpush.msra.mxu0 0.0
  %605 = vmatpush.msra.mxu0 0.0
  %606 = vmatpush.msra.mxu0 0.0
  %607 = vmatpush.msra.mxu0 0.0
  %608 = vmatpush.msra.mxu0 0.0
  %609 = vmatpush.msra.mxu0 0.0
  %610 = vmatpush.msra.mxu0 %v519
  %611 = vmatpush.msra.mxu0 %v518
  %612 = vmatpush.msra.mxu0 %v517
  %613 = vmatpush.msra.mxu0 %v516
  %614 = vmatpush.msra.mxu0 %v515
  %615 = vmatpush.msra.mxu0 %v514
  %616 = vmatpush.msra.mxu0 %v513
  %617 = vmatpush.msra.mxu0 %v512
  %618 = vmatmul.f32.gmra.mxu0 %v600
  %v619 = vpop.f32.mrf.mxu0
  %v620 = vadd.f32 0.0, %v619
  %621 = vdwg.mxu0
  %v622 = vadd.f32 %v596, %v620
  %v623 = vld [vmem:[%s3] sm:$0x1]
  %v625 = vperm.slane %v623, 0
  %v627 = vadd.f32 %v622, %v625
  %vm628 = vcmp.ge.f32.partialorder %v627, 0.0
  %v629 = vmul.f32 %v627, 0.01
  %v630 = vsel %vm628, %v627, %v629
  %vm631 = vcmask 517120
  %v632 = vsel %vm631, %v630, 0.0
  %v633 = vrot.slane %v632, 4
  %v634 = vadd.f32 %v632, %v633
  %v635 = vrot.slane %v634, 2
  %v636 = vadd.f32 %v634, %v635
  %v637 = vrot.slane %v636, 1
  %v638 = vadd.f32 %v636, %v637
  %v639 = vrcp.pop 2.0
  %v640 = vmul.f32 2.0, %v639
  %v641 = vsub.f32 1.0, %v640
  %v642 = vmul.f32 %v639, %v641
  %v643 = vadd.f32 %v639, %v642
  %vm644 = vweird.f32 %v639
  %v645 = vsel %vm644, %v639, %v643
  %v646 = vmul.f32 %v638, %v645
  %v647 = vmul.f32 %v630, %v630
  %v648 = vsel %vm631, %v647, 0.0
  %v649 = vrot.slane %v648, 4
  %v650 = vadd.f32 %v648, %v649
  %v651 = vrot.slane %v650, 2
  %v652 = vadd.f32 %v650, %v651
  %v653 = vrot.slane %v652, 1
  %v654 = vadd.f32 %v652, %v653
  %v655 = vmul.f32 %v654, %v645
  %v656 = vmul.f32 %v646, %v646
  %v657 = vsub.f32 %v655, %v656
  %v658 = vmax.f32 %v657, 0.0
  %v659 = vsub.f32 %v630, %v646
  %v660 = vadd.f32 %v658, 1e-05
  %v661 = vrsqrt.pop %v660
  %v662 = vmul.f32 %v661, %v660
  %v663 = vmul.f32 %v662, %v661
  %v664 = vmul.f32 0.5, %v663
  %v665 = vsub.f32 1.5, %v664
  %v666 = vmul.f32 %v661, %v665
  %vm667 = vweird.f32 %v660
  %vm668 = vweird.f32 %v661
  %vm669 = vmor %vm667, %vm668
  %v670 = vsel %vm669, %v661, %v666
  %v671 = vmul.f32 %v659, %v670
  %v672 = vld [vmem:[%s4] sm:$0x1]
  %v674 = vperm.slane %v672, 0
  %v676 = vmul.f32 %v671, %v674
  %v677 = vld [vmem:[%s5] sm:$0x1]
  %v679 = vperm.slane %v677, 0
  %v681 = vadd.f32 %v676, %v679
  %v682 = vld [vmem:[%s6] sm:$0xff]
  %v683 = vld [vmem:[%s6 + $0x8] sm:$0xff]
  %v684 = vld [vmem:[%s6 + $0x10] sm:$0xff]
  %v685 = vld [vmem:[%s6 + $0x18] sm:$0xff]
  %v686 = vld [vmem:[%s6 + $0x20] sm:$0xff]
  %v687 = vld [vmem:[%s6 + $0x28] sm:$0xff]
  %v688 = vld [vmem:[%s6 + $0x30] sm:$0xff]
  %v689 = vld [vmem:[%s6 + $0x38] sm:$0xff]
  %v690 = vld [vmem:[%s7] sm:$0x1]
  %v692 = vperm.slane %v690, 0
  %v695 = vsel %vm109, %v681, 0
  %697 = vmatpush.msra.mxu0 0.0
  %698 = vmatpush.msra.mxu0 0.0
  %699 = vmatpush.msra.mxu0 0.0
  %700 = vmatpush.msra.mxu0 0.0
  %701 = vmatpush.msra.mxu0 0.0
  %702 = vmatpush.msra.mxu0 0.0
  %703 = vmatpush.msra.mxu0 0.0
  %704 = vmatpush.msra.mxu0 0.0
  %705 = vmatpush.msra.mxu0 %v689
  %706 = vmatpush.msra.mxu0 %v688
  %707 = vmatpush.msra.mxu0 %v687
  %708 = vmatpush.msra.mxu0 %v686
  %709 = vmatpush.msra.mxu0 %v685
  %710 = vmatpush.msra.mxu0 %v684
  %711 = vmatpush.msra.mxu0 %v683
  %712 = vmatpush.msra.mxu0 %v682
  %713 = vmatmul.f32.gmra.mxu0 %v695
  %v714 = vpop.f32.mrf.mxu0
  %v715 = vadd.f32 %v692, %v714
  %716 = vdwg.mxu0
  %vm717 = vcmp.ge.f32.partialorder %v715, 0.0
  %v718 = vmul.f32 %v715, 0.01
  %v719 = vsel %vm717, %v715, %v718
  %vm720 = vcmask 74752
  %721 = vst.msk [vmem:[%s8] sm:$0x3] %vm720, %v719
  // Predicated region
  $region34: #{dgg_forward.5} parent=0 // pred_check
    _
  $region35: #{dgg_forward.5} parent=0 // pred_check_branch
    %723 = sbr.rel (0) target = $region37
  $region36: #{dgg_forward.5} parent=0 // pred_region
    _
  $region37: #{dgg_forward.5} parent=0 // pred_fallthru
    _
  // Predicated region
  $region38: #{dgg_forward.5} parent=0 // pred_check
    _
  $region39: #{dgg_forward.5} parent=0 // pred_check_branch
    %725 = sbr.rel (0) target = $region41
  $region40: #{dgg_forward.5} parent=0 // pred_region
    _
  $region41: #{dgg_forward.5} parent=0 // pred_fallthru
    _

</llo_original>
